<compile_context>
chip_gen: v5e
topology: v5e:2x2
jax: 0.10.0
libtpu: 0.0.40
codegen_flags: <defaults>
</compile_context>

<pallas_src>
import jax
import jax.numpy as jnp
from jax import lax
from jax.experimental import pallas as pl
from jax.experimental.pallas import tpu as pltpu

# Make the f32 reference (and any interpreted in-kernel dots) use exact f32
# matmuls on TPU instead of low-precision default MXU passes.
jax.config.update("jax_default_matmul_precision", "highest")

# ---------------------------------------------------------------------------
# Model configuration (small synthetic shapes consistent with the module).
# ---------------------------------------------------------------------------
BATCH = 2
PATCHES = 8          # sequence length (number of image patches)
HIDDEN = 32          # embed_dim
NUM_HEADS = 4
HEAD_DIM = HIDDEN // NUM_HEADS
SCALE = HEAD_DIM ** (-0.5)


# ---------------------------------------------------------------------------
# Pallas kernel: PixtralAttention forward for one batch element per grid step.
# ---------------------------------------------------------------------------
def pixtral_attention_kernel(x_ref, wqkv_ref, wo_ref, cos_ref, sin_ref, o_ref):
    D = HIDDEN
    hd = HEAD_DIM
    half = hd // 2

    x = x_ref[0]                                                    # (P, D)

    # Fused [ q | k | v ] projection: one MXU contraction -> (P, 3D).
    qkv = jnp.dot(x, wqkv_ref[...], preferred_element_type=jnp.float32)

    cos = cos_ref[...]                                              # (P, hd)
    sin = sin_ref[...]                                              # (P, hd)

    def rope(t):
        # rotate_half via static slice + negate + concat (no weight folding).
        t_rot = jnp.concatenate([-t[:, half:], t[:, :half]], axis=-1)
        return t * cos + t_rot * sin

    head_outs = []
    for h in range(NUM_HEADS):                    # static unroll, H is small
        qh = rope(qkv[:, h * hd:(h + 1) * hd]) * SCALE              # (P, hd)
        kh = rope(qkv[:, D + h * hd:D + (h + 1) * hd])              # (P, hd)
        vh = qkv[:, 2 * D + h * hd:2 * D + (h + 1) * hd]            # (P, hd)

        # Scores contract over head_dim only (no explicit transpose of k).
        s = lax.dot_general(qh, kh, (((1,), (1,)), ((), ())),
                            preferred_element_type=jnp.float32)     # (P, P)

        # Exact row softmax.
        s = s - jnp.max(s, axis=-1, keepdims=True)
        p = jnp.exp(s)
        p = p / jnp.sum(p, axis=-1, keepdims=True)

        head_outs.append(jnp.dot(p, vh,
                                 preferred_element_type=jnp.float32))

    attn = jnp.concatenate(head_outs, axis=-1)                      # (P, D)

    # Output projection.
    o_ref[0] = jnp.dot(attn, wo_ref[...],
                       preferred_element_type=jnp.float32).astype(o_ref.dtype)


# ---------------------------------------------------------------------------
# Wrapper: grid over batch, everything else resident / re-used across steps.
# ---------------------------------------------------------------------------
@jax.jit
def pixtral_attention(hidden_states, wqkv, wo, cos, sin):
    B, P, D = hidden_states.shape
    hd = HEAD_DIM
    return pl.pallas_call(
        pixtral_attention_kernel,
        out_shape=jax.ShapeDtypeStruct((B, P, D), hidden_states.dtype),
        grid=(B,),
        in_specs=[
            pl.BlockSpec((1, P, D), lambda b: (b, 0, 0)),       # activations
            pl.BlockSpec((D, 3 * D), lambda b: (0, 0)),         # fused W_qkv
            pl.BlockSpec((D, D), lambda b: (0, 0)),             # W_o
            pl.BlockSpec((P, hd), lambda b: (0, 0)),            # cos (untiled)
            pl.BlockSpec((P, hd), lambda b: (0, 0)),            # sin (untiled)
        ],
        out_specs=pl.BlockSpec((1, P, D), lambda b: (b, 0, 0)),
        compiler_params=pltpu.CompilerParams(
            dimension_semantics=("parallel",)),
    )(hidden_states, wqkv, wo, cos, sin)


# ---------------------------------------------------------------------------
# Pure-JAX reference (mirrors the PyTorch forward exactly) for validation.
# ---------------------------------------------------------------------------
def reference_forward(x, wq, wk, wv, wo, cos, sin):
    B, P, D = x.shape
    q = (x @ wq).reshape(B, P, NUM_HEADS, HEAD_DIM).transpose(0, 2, 1, 3)
    k = (x @ wk).reshape(B, P, NUM_HEADS, HEAD_DIM).transpose(0, 2, 1, 3)
    v = (x @ wv).reshape(B, P, NUM_HEADS, HEAD_DIM).transpose(0, 2, 1, 3)

    # apply_rotary_pos_emb with unsqueeze_dim=0: cos (P, hd) broadcasts over
    # batch and heads.
    c = cos[None, None, :, :]
    s = sin[None, None, :, :]

    def rotate_half(t):
        t1 = t[..., : HEAD_DIM // 2]
        t2 = t[..., HEAD_DIM // 2:]
        return jnp.concatenate([-t2, t1], axis=-1)

    q = q * c + rotate_half(q) * s
    k = k * c + rotate_half(k) * s

    scores = jnp.einsum('bhqd,bhkd->bhqk', q, k) * SCALE
    probs = jax.nn.softmax(scores, axis=-1)
    out = jnp.einsum('bhqk,bhkd->bhqd', probs, v)          # (B, H, P, hd)
    out = out.transpose(0, 2, 1, 3).reshape(B, P, D)       # (B, P, D)
    return out @ wo


# ---------------------------------------------------------------------------
# Main: deterministic params + inputs, run kernel, validate, print KERNEL_OK.
# ---------------------------------------------------------------------------
if __name__ == "__main__":
    key = jax.random.PRNGKey(0)
    k_x, k_q, k_k, k_v, k_o = jax.random.split(key, 5)

    hidden_states = jax.random.normal(k_x, (BATCH, PATCHES, HIDDEN), jnp.float32)

    # nn.Linear(embed_dim, embed_dim, bias=False) weights, stored here already
    # transposed to (in, out) so the kernel computes y = x @ W.
    init_scale = HIDDEN ** (-0.5)
    wq = jax.random.normal(k_q, (HIDDEN, HIDDEN), jnp.float32) * init_scale
    wk = jax.random.normal(k_k, (HIDDEN, HIDDEN), jnp.float32) * init_scale
    wv = jax.random.normal(k_v, (HIDDEN, HIDDEN), jnp.float32) * init_scale
    wo = jax.random.normal(k_o, (HIDDEN, HIDDEN), jnp.float32) * init_scale

    # Fused QKV weight, built ONCE outside the jitted per-call wrapper.
    wqkv = jnp.concatenate([wq, wk, wv], axis=1)           # (D, 3D)

    # Deterministic rotary position embeddings of shape (patches, head_dim),
    # matching what PixtralRotaryEmbedding feeds to the attention layer.
    inv_freq = 1.0 / (10000.0 ** (jnp.arange(0, HEAD_DIM, 2, dtype=jnp.float32)
                                  / HEAD_DIM))
    pos = jnp.arange(PATCHES, dtype=jnp.float32)
    freqs = jnp.outer(pos, inv_freq)                        # (P, hd/2)
    emb = jnp.concatenate([freqs, freqs], axis=-1)          # (P, hd)
    cos = jnp.cos(emb)
    sin = jnp.sin(emb)

    out = pixtral_attention(hidden_states, wqkv, wo, cos, sin)
    out = jax.block_until_ready(out)

    ref = reference_forward(hidden_states, wq, wk, wv, wo, cos, sin)
    assert out.shape == (BATCH, PATCHES, HIDDEN)
    assert jnp.allclose(out, ref, atol=2e-4, rtol=2e-4), "mismatch vs reference"

    print("KERNEL_OK")
</pallas_src>

<mosaic_0001>
module attributes {stable_mosaic.version = 11 : i64} {
  func.func @pixtral_attention_kernel(%arg0: i32, %arg1: memref<1x8x32xf32, #tpu.memory_space<vmem>>, %arg2: memref<32x96xf32, #tpu.memory_space<vmem>>, %arg3: memref<32x32xf32, #tpu.memory_space<vmem>>, %arg4: memref<8x8xf32, #tpu.memory_space<vmem>>, %arg5: memref<8x8xf32, #tpu.memory_space<vmem>>, %arg6: memref<1x8x32xf32, #tpu.memory_space<vmem>>) attributes {dimension_semantics = [#tpu.dimension_semantics<parallel>], iteration_bounds = array<i64: 2>, scalar_prefetch = 0 : i64, scratch_operands = 0 : i64, tpu.core_type = #tpu.core_type<tc>, window_params = [{transform_indices = @transform_0, window_bounds = array<i64: 1, 8, 32>}, {pipeline_mode = #tpu.pipeline_mode<synchronous>, transform_indices = @transform_1, window_bounds = array<i64: 32, 96>}, {pipeline_mode = #tpu.pipeline_mode<synchronous>, transform_indices = @transform_2, window_bounds = array<i64: 32, 32>}, {pipeline_mode = #tpu.pipeline_mode<synchronous>, transform_indices = @transform_3, window_bounds = array<i64: 8, 8>}, {pipeline_mode = #tpu.pipeline_mode<synchronous>, transform_indices = @transform_4, window_bounds = array<i64: 8, 8>}, {transform_indices = @transform_5, window_bounds = array<i64: 1, 8, 32>}]} {
    %c0 = arith.constant 0 : index
    %c0_0 = arith.constant 0 : index
    %c0_1 = arith.constant 0 : index
    %0 = vector.load %arg1[%c0, %c0_0, %c0_1] : memref<1x8x32xf32, #tpu.memory_space<vmem>>, vector<1x8x32xf32>
    %1 = vector.shape_cast %0 : vector<1x8x32xf32> to vector<8x32xf32>
    %c0_2 = arith.constant 0 : index
    %c0_3 = arith.constant 0 : index
    %2 = vector.load %arg2[%c0_2, %c0_3] : memref<32x96xf32, #tpu.memory_space<vmem>>, vector<32x96xf32>
    %cst = arith.constant dense<0.000000e+00> : vector<8x96xf32>
    %3 = tpu.matmul %1, %2, %cst {dimension_numbers = #tpu.dot_dimension_numbers<[1], [0], [0], [1], [0, 0, 1, 1], [], []>, precision = #tpu.contract_precision<fp32>} : vector<8x32xf32>, vector<32x96xf32>, vector<8x96xf32> -> vector<8x96xf32>
    %c0_4 = arith.constant 0 : index
    %c0_5 = arith.constant 0 : index
    %4 = vector.load %arg4[%c0_4, %c0_5] : memref<8x8xf32, #tpu.memory_space<vmem>>, vector<8x8xf32>
    %c0_6 = arith.constant 0 : index
    %c0_7 = arith.constant 0 : index
    %5 = vector.load %arg5[%c0_6, %c0_7] : memref<8x8xf32, #tpu.memory_space<vmem>>, vector<8x8xf32>
    %6 = vector.extract_strided_slice %3 {offsets = [0, 0], sizes = [8, 8], strides = [1, 1]} : vector<8x96xf32> to vector<8x8xf32>
    %7 = vector.extract_strided_slice %6 {offsets = [0, 4], sizes = [8, 4], strides = [1, 1]} : vector<8x8xf32> to vector<8x4xf32>
    %cst_8 = arith.constant 0.000000e+00 : f32
    %8 = vector.broadcast %cst_8 : f32 to vector<8x4xf32>
    %9 = arith.subf %8, %7 : vector<8x4xf32>
    %10 = vector.extract_strided_slice %6 {offsets = [0, 0], sizes = [8, 4], strides = [1, 1]} : vector<8x8xf32> to vector<8x4xf32>
    %11 = tpu.concatenate %9, %10 in 1 : vector<8x4xf32>, vector<8x4xf32> -> vector<8x8xf32>
    %12 = arith.mulf %6, %4 : vector<8x8xf32>
    %13 = arith.mulf %11, %5 : vector<8x8xf32>
    %14 = arith.addf %12, %13 : vector<8x8xf32>
    %cst_9 = arith.constant 0.353553385 : f32
    %15 = vector.broadcast %cst_9 : f32 to vector<8x8xf32>
    %16 = arith.mulf %14, %15 : vector<8x8xf32>
    %17 = vector.extract_strided_slice %3 {offsets = [0, 32], sizes = [8, 8], strides = [1, 1]} : vector<8x96xf32> to vector<8x8xf32>
    %18 = vector.extract_strided_slice %17 {offsets = [0, 4], sizes = [8, 4], strides = [1, 1]} : vector<8x8xf32> to vector<8x4xf32>
    %cst_10 = arith.constant 0.000000e+00 : f32
    %19 = vector.broadcast %cst_10 : f32 to vector<8x4xf32>
    %20 = arith.subf %19, %18 : vector<8x4xf32>
    %21 = vector.extract_strided_slice %17 {offsets = [0, 0], sizes = [8, 4], strides = [1, 1]} : vector<8x8xf32> to vector<8x4xf32>
    %22 = tpu.concatenate %20, %21 in 1 : vector<8x4xf32>, vector<8x4xf32> -> vector<8x8xf32>
    %23 = arith.mulf %17, %4 : vector<8x8xf32>
    %24 = arith.mulf %22, %5 : vector<8x8xf32>
    %25 = arith.addf %23, %24 : vector<8x8xf32>
    %26 = vector.extract_strided_slice %3 {offsets = [0, 64], sizes = [8, 8], strides = [1, 1]} : vector<8x96xf32> to vector<8x8xf32>
    %cst_11 = arith.constant dense<0.000000e+00> : vector<8x8xf32>
    %27 = tpu.matmul %16, %25, %cst_11 {dimension_numbers = #tpu.dot_dimension_numbers<[1], [1], [0], [0], [0, 0, 1, 0], [], []>, precision = #tpu.contract_precision<fp32>} : vector<8x8xf32>, vector<8x8xf32>, vector<8x8xf32> -> vector<8x8xf32>
    %cst_12 = arith.constant dense<0xFF800000> : vector<8xf32>
    %28 = vector.multi_reduction <maximumf>, %27, %cst_12 [1] : vector<8x8xf32> to vector<8xf32>
    %29 = vector.shape_cast %28 : vector<8xf32> to vector<8x1xf32>
    %30 = vector.broadcast %29 : vector<8x1xf32> to vector<8x8xf32>
    %31 = arith.subf %27, %30 : vector<8x8xf32>
    %32 = math.exp %31 : vector<8x8xf32>
    %cst_13 = arith.constant dense<0.000000e+00> : vector<8xf32>
    %33 = vector.multi_reduction <add>, %32, %cst_13 [1] : vector<8x8xf32> to vector<8xf32>
    %34 = vector.shape_cast %33 : vector<8xf32> to vector<8x1xf32>
    %35 = vector.broadcast %34 : vector<8x1xf32> to vector<8x8xf32>
    %36 = arith.divf %32, %35 : vector<8x8xf32>
    %cst_14 = arith.constant dense<0.000000e+00> : vector<8x8xf32>
    %37 = tpu.matmul %36, %26, %cst_14 {dimension_numbers = #tpu.dot_dimension_numbers<[1], [0], [0], [1], [0, 0, 1, 1], [], []>, precision = #tpu.contract_precision<fp32>} : vector<8x8xf32>, vector<8x8xf32>, vector<8x8xf32> -> vector<8x8xf32>
    %38 = vector.extract_strided_slice %3 {offsets = [0, 8], sizes = [8, 8], strides = [1, 1]} : vector<8x96xf32> to vector<8x8xf32>
    %39 = vector.extract_strided_slice %38 {offsets = [0, 4], sizes = [8, 4], strides = [1, 1]} : vector<8x8xf32> to vector<8x4xf32>
    %cst_15 = arith.constant 0.000000e+00 : f32
    %40 = vector.broadcast %cst_15 : f32 to vector<8x4xf32>
    %41 = arith.subf %40, %39 : vector<8x4xf32>
    %42 = vector.extract_strided_slice %38 {offsets = [0, 0], sizes = [8, 4], strides = [1, 1]} : vector<8x8xf32> to vector<8x4xf32>
    %43 = tpu.concatenate %41, %42 in 1 : vector<8x4xf32>, vector<8x4xf32> -> vector<8x8xf32>
    %44 = arith.mulf %38, %4 : vector<8x8xf32>
    %45 = arith.mulf %43, %5 : vector<8x8xf32>
    %46 = arith.addf %44, %45 : vector<8x8xf32>
    %cst_16 = arith.constant 0.353553385 : f32
    %47 = vector.broadcast %cst_16 : f32 to vector<8x8xf32>
    %48 = arith.mulf %46, %47 : vector<8x8xf32>
    %49 = vector.extract_strided_slice %3 {offsets = [0, 40], sizes = [8, 8], strides = [1, 1]} : vector<8x96xf32> to vector<8x8xf32>
    %50 = vector.extract_strided_slice %49 {offsets = [0, 4], sizes = [8, 4], strides = [1, 1]} : vector<8x8xf32> to vector<8x4xf32>
    %cst_17 = arith.constant 0.000000e+00 : f32
    %51 = vector.broadcast %cst_17 : f32 to vector<8x4xf32>
    %52 = arith.subf %51, %50 : vector<8x4xf32>
    %53 = vector.extract_strided_slice %49 {offsets = [0, 0], sizes = [8, 4], strides = [1, 1]} : vector<8x8xf32> to vector<8x4xf32>
    %54 = tpu.concatenate %52, %53 in 1 : vector<8x4xf32>, vector<8x4xf32> -> vector<8x8xf32>
    %55 = arith.mulf %49, %4 : vector<8x8xf32>
    %56 = arith.mulf %54, %5 : vector<8x8xf32>
    %57 = arith.addf %55, %56 : vector<8x8xf32>
    %58 = vector.extract_strided_slice %3 {offsets = [0, 72], sizes = [8, 8], strides = [1, 1]} : vector<8x96xf32> to vector<8x8xf32>
    %cst_18 = arith.constant dense<0.000000e+00> : vector<8x8xf32>
    %59 = tpu.matmul %48, %57, %cst_18 {dimension_numbers = #tpu.dot_dimension_numbers<[1], [1], [0], [0], [0, 0, 1, 0], [], []>, precision = #tpu.contract_precision<fp32>} : vector<8x8xf32>, vector<8x8xf32>, vector<8x8xf32> -> vector<8x8xf32>
    %cst_19 = arith.constant dense<0xFF800000> : vector<8xf32>
    %60 = vector.multi_reduction <maximumf>, %59, %cst_19 [1] : vector<8x8xf32> to vector<8xf32>
    %61 = vector.shape_cast %60 : vector<8xf32> to vector<8x1xf32>
    %62 = vector.broadcast %61 : vector<8x1xf32> to vector<8x8xf32>
    %63 = arith.subf %59, %62 : vector<8x8xf32>
    %64 = math.exp %63 : vector<8x8xf32>
    %cst_20 = arith.constant dense<0.000000e+00> : vector<8xf32>
    %65 = vector.multi_reduction <add>, %64, %cst_20 [1] : vector<8x8xf32> to vector<8xf32>
    %66 = vector.shape_cast %65 : vector<8xf32> to vector<8x1xf32>
    %67 = vector.broadcast %66 : vector<8x1xf32> to vector<8x8xf32>
    %68 = arith.divf %64, %67 : vector<8x8xf32>
    %cst_21 = arith.constant dense<0.000000e+00> : vector<8x8xf32>
    %69 = tpu.matmul %68, %58, %cst_21 {dimension_numbers = #tpu.dot_dimension_numbers<[1], [0], [0], [1], [0, 0, 1, 1], [], []>, precision = #tpu.contract_precision<fp32>} : vector<8x8xf32>, vector<8x8xf32>, vector<8x8xf32> -> vector<8x8xf32>
    %70 = vector.extract_strided_slice %3 {offsets = [0, 16], sizes = [8, 8], strides = [1, 1]} : vector<8x96xf32> to vector<8x8xf32>
    %71 = vector.extract_strided_slice %70 {offsets = [0, 4], sizes = [8, 4], strides = [1, 1]} : vector<8x8xf32> to vector<8x4xf32>
    %cst_22 = arith.constant 0.000000e+00 : f32
    %72 = vector.broadcast %cst_22 : f32 to vector<8x4xf32>
    %73 = arith.subf %72, %71 : vector<8x4xf32>
    %74 = vector.extract_strided_slice %70 {offsets = [0, 0], sizes = [8, 4], strides = [1, 1]} : vector<8x8xf32> to vector<8x4xf32>
    %75 = tpu.concatenate %73, %74 in 1 : vector<8x4xf32>, vector<8x4xf32> -> vector<8x8xf32>
    %76 = arith.mulf %70, %4 : vector<8x8xf32>
    %77 = arith.mulf %75, %5 : vector<8x8xf32>
    %78 = arith.addf %76, %77 : vector<8x8xf32>
    %cst_23 = arith.constant 0.353553385 : f32
    %79 = vector.broadcast %cst_23 : f32 to vector<8x8xf32>
    %80 = arith.mulf %78, %79 : vector<8x8xf32>
    %81 = vector.extract_strided_slice %3 {offsets = [0, 48], sizes = [8, 8], strides = [1, 1]} : vector<8x96xf32> to vector<8x8xf32>
    %82 = vector.extract_strided_slice %81 {offsets = [0, 4], sizes = [8, 4], strides = [1, 1]} : vector<8x8xf32> to vector<8x4xf32>
    %cst_24 = arith.constant 0.000000e+00 : f32
    %83 = vector.broadcast %cst_24 : f32 to vector<8x4xf32>
    %84 = arith.subf %83, %82 : vector<8x4xf32>
    %85 = vector.extract_strided_slice %81 {offsets = [0, 0], sizes = [8, 4], strides = [1, 1]} : vector<8x8xf32> to vector<8x4xf32>
    %86 = tpu.concatenate %84, %85 in 1 : vector<8x4xf32>, vector<8x4xf32> -> vector<8x8xf32>
    %87 = arith.mulf %81, %4 : vector<8x8xf32>
    %88 = arith.mulf %86, %5 : vector<8x8xf32>
    %89 = arith.addf %87, %88 : vector<8x8xf32>
    %90 = vector.extract_strided_slice %3 {offsets = [0, 80], sizes = [8, 8], strides = [1, 1]} : vector<8x96xf32> to vector<8x8xf32>
    %cst_25 = arith.constant dense<0.000000e+00> : vector<8x8xf32>
    %91 = tpu.matmul %80, %89, %cst_25 {dimension_numbers = #tpu.dot_dimension_numbers<[1], [1], [0], [0], [0, 0, 1, 0], [], []>, precision = #tpu.contract_precision<fp32>} : vector<8x8xf32>, vector<8x8xf32>, vector<8x8xf32> -> vector<8x8xf32>
    %cst_26 = arith.constant dense<0xFF800000> : vector<8xf32>
    %92 = vector.multi_reduction <maximumf>, %91, %cst_26 [1] : vector<8x8xf32> to vector<8xf32>
    %93 = vector.shape_cast %92 : vector<8xf32> to vector<8x1xf32>
    %94 = vector.broadcast %93 : vector<8x1xf32> to vector<8x8xf32>
    %95 = arith.subf %91, %94 : vector<8x8xf32>
    %96 = math.exp %95 : vector<8x8xf32>
    %cst_27 = arith.constant dense<0.000000e+00> : vector<8xf32>
    %97 = vector.multi_reduction <add>, %96, %cst_27 [1] : vector<8x8xf32> to vector<8xf32>
    %98 = vector.shape_cast %97 : vector<8xf32> to vector<8x1xf32>
    %99 = vector.broadcast %98 : vector<8x1xf32> to vector<8x8xf32>
    %100 = arith.divf %96, %99 : vector<8x8xf32>
    %cst_28 = arith.constant dense<0.000000e+00> : vector<8x8xf32>
    %101 = tpu.matmul %100, %90, %cst_28 {dimension_numbers = #tpu.dot_dimension_numbers<[1], [0], [0], [1], [0, 0, 1, 1], [], []>, precision = #tpu.contract_precision<fp32>} : vector<8x8xf32>, vector<8x8xf32>, vector<8x8xf32> -> vector<8x8xf32>
    %102 = vector.extract_strided_slice %3 {offsets = [0, 24], sizes = [8, 8], strides = [1, 1]} : vector<8x96xf32> to vector<8x8xf32>
    %103 = vector.extract_strided_slice %102 {offsets = [0, 4], sizes = [8, 4], strides = [1, 1]} : vector<8x8xf32> to vector<8x4xf32>
    %cst_29 = arith.constant 0.000000e+00 : f32
    %104 = vector.broadcast %cst_29 : f32 to vector<8x4xf32>
    %105 = arith.subf %104, %103 : vector<8x4xf32>
    %106 = vector.extract_strided_slice %102 {offsets = [0, 0], sizes = [8, 4], strides = [1, 1]} : vector<8x8xf32> to vector<8x4xf32>
    %107 = tpu.concatenate %105, %106 in 1 : vector<8x4xf32>, vector<8x4xf32> -> vector<8x8xf32>
    %108 = arith.mulf %102, %4 : vector<8x8xf32>
    %109 = arith.mulf %107, %5 : vector<8x8xf32>
    %110 = arith.addf %108, %109 : vector<8x8xf32>
    %cst_30 = arith.constant 0.353553385 : f32
    %111 = vector.broadcast %cst_30 : f32 to vector<8x8xf32>
    %112 = arith.mulf %110, %111 : vector<8x8xf32>
    %113 = vector.extract_strided_slice %3 {offsets = [0, 56], sizes = [8, 8], strides = [1, 1]} : vector<8x96xf32> to vector<8x8xf32>
    %114 = vector.extract_strided_slice %113 {offsets = [0, 4], sizes = [8, 4], strides = [1, 1]} : vector<8x8xf32> to vector<8x4xf32>
    %cst_31 = arith.constant 0.000000e+00 : f32
    %115 = vector.broadcast %cst_31 : f32 to vector<8x4xf32>
    %116 = arith.subf %115, %114 : vector<8x4xf32>
    %117 = vector.extract_strided_slice %113 {offsets = [0, 0], sizes = [8, 4], strides = [1, 1]} : vector<8x8xf32> to vector<8x4xf32>
    %118 = tpu.concatenate %116, %117 in 1 : vector<8x4xf32>, vector<8x4xf32> -> vector<8x8xf32>
    %119 = arith.mulf %113, %4 : vector<8x8xf32>
    %120 = arith.mulf %118, %5 : vector<8x8xf32>
    %121 = arith.addf %119, %120 : vector<8x8xf32>
    %122 = vector.extract_strided_slice %3 {offsets = [0, 88], sizes = [8, 8], strides = [1, 1]} : vector<8x96xf32> to vector<8x8xf32>
    %cst_32 = arith.constant dense<0.000000e+00> : vector<8x8xf32>
    %123 = tpu.matmul %112, %121, %cst_32 {dimension_numbers = #tpu.dot_dimension_numbers<[1], [1], [0], [0], [0, 0, 1, 0], [], []>, precision = #tpu.contract_precision<fp32>} : vector<8x8xf32>, vector<8x8xf32>, vector<8x8xf32> -> vector<8x8xf32>
    %cst_33 = arith.constant dense<0xFF800000> : vector<8xf32>
    %124 = vector.multi_reduction <maximumf>, %123, %cst_33 [1] : vector<8x8xf32> to vector<8xf32>
    %125 = vector.shape_cast %124 : vector<8xf32> to vector<8x1xf32>
    %126 = vector.broadcast %125 : vector<8x1xf32> to vector<8x8xf32>
    %127 = arith.subf %123, %126 : vector<8x8xf32>
    %128 = math.exp %127 : vector<8x8xf32>
    %cst_34 = arith.constant dense<0.000000e+00> : vector<8xf32>
    %129 = vector.multi_reduction <add>, %128, %cst_34 [1] : vector<8x8xf32> to vector<8xf32>
    %130 = vector.shape_cast %129 : vector<8xf32> to vector<8x1xf32>
    %131 = vector.broadcast %130 : vector<8x1xf32> to vector<8x8xf32>
    %132 = arith.divf %128, %131 : vector<8x8xf32>
    %cst_35 = arith.constant dense<0.000000e+00> : vector<8x8xf32>
    %133 = tpu.matmul %132, %122, %cst_35 {dimension_numbers = #tpu.dot_dimension_numbers<[1], [0], [0], [1], [0, 0, 1, 1], [], []>, precision = #tpu.contract_precision<fp32>} : vector<8x8xf32>, vector<8x8xf32>, vector<8x8xf32> -> vector<8x8xf32>
    %134 = tpu.concatenate %37, %69, %101, %133 in 1 : vector<8x8xf32>, vector<8x8xf32>, vector<8x8xf32>, vector<8x8xf32> -> vector<8x32xf32>
    %c0_36 = arith.constant 0 : index
    %c0_37 = arith.constant 0 : index
    %135 = vector.load %arg3[%c0_36, %c0_37] : memref<32x32xf32, #tpu.memory_space<vmem>>, vector<32x32xf32>
    %cst_38 = arith.constant dense<0.000000e+00> : vector<8x32xf32>
    %136 = tpu.matmul %134, %135, %cst_38 {dimension_numbers = #tpu.dot_dimension_numbers<[1], [0], [0], [1], [0, 0, 1, 1], [], []>, precision = #tpu.contract_precision<fp32>} : vector<8x32xf32>, vector<32x32xf32>, vector<8x32xf32> -> vector<8x32xf32>
    %c0_39 = arith.constant 0 : index
    %c0_40 = arith.constant 0 : index
    %c0_41 = arith.constant 0 : index
    %137 = vector.load %arg6[%c0_39, %c0_40, %c0_41] : memref<1x8x32xf32, #tpu.memory_space<vmem>>, vector<1x8x32xf32>
    %138 = vector.shape_cast %137 : vector<1x8x32xf32> to vector<8x32xf32>
    %139 = vector.shape_cast %136 : vector<8x32xf32> to vector<1x8x32xf32>
    tpu.vector_store %arg6[%c0_39, %c0_40, %c0_41], %139 {strides = array<i32>} : memref<1x8x32xf32, #tpu.memory_space<vmem>>, vector<1x8x32xf32>,
    return
  }
  func.func @transform_0(%arg0: i32) -> (i32, i32, i32) {
    %c0_i32 = arith.constant 0 : i32
    %c0_i32_0 = arith.constant 0 : i32
    %c0_i32_1 = arith.constant 0 : i32
    return %arg0, %c0_i32, %c0_i32_0 : i32, i32, i32
  }
  func.func @transform_1(%arg0: i32) -> (i32, i32) {
    %c0_i32 = arith.constant 0 : i32
    %c0_i32_0 = arith.constant 0 : i32
    %c0_i32_1 = arith.constant 0 : i32
    return %c0_i32, %c0_i32_0 : i32, i32
  }
  func.func @transform_2(%arg0: i32) -> (i32, i32) {
    %c0_i32 = arith.constant 0 : i32
    %c0_i32_0 = arith.constant 0 : i32
    %c0_i32_1 = arith.constant 0 : i32
    return %c0_i32, %c0_i32_0 : i32, i32
  }
  func.func @transform_3(%arg0: i32) -> (i32, i32) {
    %c0_i32 = arith.constant 0 : i32
    %c0_i32_0 = arith.constant 0 : i32
    %c0_i32_1 = arith.constant 0 : i32
    return %c0_i32, %c0_i32_0 : i32, i32
  }
  func.func @transform_4(%arg0: i32) -> (i32, i32) {
    %c0_i32 = arith.constant 0 : i32
    %c0_i32_0 = arith.constant 0 : i32
    %c0_i32_1 = arith.constant 0 : i32
    return %c0_i32, %c0_i32_0 : i32, i32
  }
  func.func @transform_5(%arg0: i32) -> (i32, i32, i32) {
    %c0_i32 = arith.constant 0 : i32
    %c0_i32_0 = arith.constant 0 : i32
    %c0_i32_1 = arith.constant 0 : i32
    return %arg0, %c0_i32, %c0_i32_0 : i32, i32, i32
  }
}

</mosaic_0001>

<llo_original>
// kernel: pixtral_attention.1
$region0: #{pixtral_attention.1}
  #allocation0 [shape = 'u32[]', space=smem, size = 0x4, offset = 0x4, fixed_abs, tag = 'smem constant byte address 0x4 - core index']
  #allocation1 [shape = 'u32[72,128]{1,0:T(1,128)}', space=vmem, size = 0x9000, scoped, tag = 'internal scratch']
  %s0 = inlined_call_operand.hbm [shape: f32[2,8,32], index: 0, kind: input, shape index: {}]
  %s1 = inlined_call_operand.hbm [shape: f32[32,96], index: 1, kind: input, shape index: {}]
  %s2 = inlined_call_operand.hbm [shape: f32[32,32], index: 2, kind: input, shape index: {}]
  %s3 = inlined_call_operand.hbm [shape: f32[8,8], index: 3, kind: input, shape index: {}]
  %s4 = inlined_call_operand.hbm [shape: f32[8,8], index: 4, kind: input, shape index: {}]
  %s5 = inlined_call_operand.hbm [shape: f32[2,8,32], index: 5, kind: output, shape index: {}]
  %s6 = sld [smem:[#allocation0]]
  $region73: #{pixtral_attention.1} parent=0
    _
  %s8 = ssub.s32 1, %s6
  %s9 = scalar_select 0, %s8, %s6
  $region1: #{pixtral_attention.1} parent=0
    #allocation2 [shape = 'u8[8192]{0}', space=vmem, size = 0x2000, scoped, tag = 'input window, operand 0']
    #allocation3 [shape = 's32[2]{0}', space=sflag, size = 0x8, scoped, tag = 'scoped memory for pixtral_attention.1']
    #allocation4 [shape = 's32[2]{0}', space=sflag, size = 0x8, scoped, tag = 'scoped memory for pixtral_attention.1']
    #allocation5 [shape = 'u8[16384]{0}', space=vmem, size = 0x4000, scoped, tag = 'input window, operand 1, single buffered']
    #allocation6 [shape = 's32[1]{0}', space=sflag, size = 0x4, scoped, tag = 'scoped memory for pixtral_attention.1']
    #allocation7 [shape = 'u8[16384]{0}', space=vmem, size = 0x4000, scoped, tag = 'input window, operand 2, single buffered']
    #allocation8 [shape = 'u8[4096]{0}', space=vmem, size = 0x1000, scoped, tag = 'input window, operand 3, single buffered']
    #allocation9 [shape = 's32[1]{0}', space=sflag, size = 0x4, scoped, tag = 'scoped memory for pixtral_attention.1']
    #allocation10 [shape = 'u8[4096]{0}', space=vmem, size = 0x1000, scoped, tag = 'input window, operand 4, single buffered']
    #allocation11 [shape = 'u8[8192]{0}', space=vmem, size = 0x2000, scoped, tag = 'output window, operand 0']
    %10 = vsyncpa [#allocation3], 0
    %s11 = scalar_lea.sflag [#allocation3], 1
    %12 = vsyncpa %s11, 0
    %13 = vsyncpa [#allocation6], 0
    %14 = vsyncpa [#allocation9], 0
    %15 = vsyncpa [#allocation4], 0
    %s16 = scalar_lea.sflag [#allocation4], 1
    %17 = vsyncpa %s16, 0
    loop: start=0, step=1, limit=4
    $region2: #{pixtral_attention.1} parent=1 // loop_pre_header
      _
    $region3: #{pixtral_attention.1} parent=1 // loop_header
      %s19 = sphi 0, %s23
      %p20 = scmp.ge.s32.totalorder %s19, 4
      %s29 = sphi 0, %s31
      %s32 = sphi 0, %s29
      %s33 = sphi 0, %s32
      %s49 = sphi 0, %s33
      %s53 = sphi 0, %s53
      %s55 = sphi 0, %s53
      %s56 = sphi 0, %s55
      %s70 = sphi 0, %s56
      %s74 = sphi 0, %s74
      %s76 = sphi 0, %s74
      %s77 = sphi 0, %s76
      %s91 = sphi 0, %s77
      %s95 = sphi 0, %s95
      %s97 = sphi 0, %s95
      %s98 = sphi 0, %s97
      %s112 = sphi 0, %s98
      %s116 = sphi 0, %s116
      %s118 = sphi 0, %s116
      %s119 = sphi 0, %s118
      %s133 = sphi 0, %s119
      %s139 = sphi 0, %s141
      %s142 = sphi 0, %s139
      %s143 = sphi 0, %s142
      %s159 = sphi 0, %s143
    $region4: #{pixtral_attention.1} parent=1 // loop_header_branch
      %22 = sbr.rel (%p20) target = $region8
    $region5: #{pixtral_attention.1} parent=1 // loop_body
      %s24 = ssub.s32 %s19, 1
      %s25 = ssub.s32 %s19, 2
      %s26 = sadd.s32 %s19, 1
      %s27 = ssub.s32 %s19, %s26
      %p28 = scmp.eq.s32.totalorder %s27, 0
      %s30 = sadd.s32 %s29, 1
      %s31 = scalar_select %p28, %s29, %s30
      %p34 = pneg %p28
      %p35 = scmp.eq.s32.totalorder %s19, 1
      %p36 = por %p34, %p35
      %p37 = scmp.ne.s32.totalorder %s29, %s32
      %p38 = scmp.eq.s32.totalorder %s19, 0
      %p39 = por %p37, %p38
      %p40 = scmp.ne.s32.totalorder %s29, %s32
      %p41 = scmp.eq.s32.totalorder %s24, 1
      %p42 = por %p40, %p41
      %p43 = scmp.ne.s32.totalorder %s32, %s33
      %p44 = scmp.eq.s32.totalorder %s24, 0
      %p45 = por %p43, %p44
      %p46 = scmp.ne.s32.totalorder %s32, %s33
      %p47 = scmp.eq.s32.totalorder %s25, 1
      %p48 = por %p46, %p47
      %p50 = scmp.ne.s32.totalorder %s33, %s49
      %p51 = scmp.eq.s32.totalorder %s25, 0
      %p52 = por %p50, %p51
      %s54 = sadd.s32 %s53, 1
      %p57 = scmp.eq.s32.totalorder %s19, 1
      %p58 = scmp.ne.s32.totalorder %s53, %s55
      %p59 = scmp.eq.s32.totalorder %s19, 0
      %p60 = por %p58, %p59
      %p61 = scmp.ne.s32.totalorder %s53, %s55
      %p62 = scmp.eq.s32.totalorder %s24, 1
      %p63 = por %p61, %p62
      %p64 = scmp.ne.s32.totalorder %s55, %s56
      %p65 = scmp.eq.s32.totalorder %s24, 0
      %p66 = por %p64, %p65
      %p67 = scmp.ne.s32.totalorder %s55, %s56
      %p68 = scmp.eq.s32.totalorder %s25, 1
      %p69 = por %p67, %p68
      %p71 = scmp.ne.s32.totalorder %s56, %s70
      %p72 = scmp.eq.s32.totalorder %s25, 0
      %p73 = por %p71, %p72
      %s75 = sadd.s32 %s74, 1
      %p78 = scmp.eq.s32.totalorder %s19, 1
      %p79 = scmp.ne.s32.totalorder %s74, %s76
      %p80 = scmp.eq.s32.totalorder %s19, 0
      %p81 = por %p79, %p80
      %p82 = scmp.ne.s32.totalorder %s74, %s76
      %p83 = scmp.eq.s32.totalorder %s24, 1
      %p84 = por %p82, %p83
      %p85 = scmp.ne.s32.totalorder %s76, %s77
      %p86 = scmp.eq.s32.totalorder %s24, 0
      %p87 = por %p85, %p86
      %p88 = scmp.ne.s32.totalorder %s76, %s77
      %p89 = scmp.eq.s32.totalorder %s25, 1
      %p90 = por %p88, %p89
      %p92 = scmp.ne.s32.totalorder %s77, %s91
      %p93 = scmp.eq.s32.totalorder %s25, 0
      %p94 = por %p92, %p93
      %s96 = sadd.s32 %s95, 1
      %p99 = scmp.eq.s32.totalorder %s19, 1
      %p100 = scmp.ne.s32.totalorder %s95, %s97
      %p101 = scmp.eq.s32.totalorder %s19, 0
      %p102 = por %p100, %p101
      %p103 = scmp.ne.s32.totalorder %s95, %s97
      %p104 = scmp.eq.s32.totalorder %s24, 1
      %p105 = por %p103, %p104
      %p106 = scmp.ne.s32.totalorder %s97, %s98
      %p107 = scmp.eq.s32.totalorder %s24, 0
      %p108 = por %p106, %p107
      %p109 = scmp.ne.s32.totalorder %s97, %s98
      %p110 = scmp.eq.s32.totalorder %s25, 1
      %p111 = por %p109, %p110
      %p113 = scmp.ne.s32.totalorder %s98, %s112
      %p114 = scmp.eq.s32.totalorder %s25, 0
      %p115 = por %p113, %p114
      %s117 = sadd.s32 %s116, 1
      %p120 = scmp.eq.s32.totalorder %s19, 1
      %p121 = scmp.ne.s32.totalorder %s116, %s118
      %p122 = scmp.eq.s32.totalorder %s19, 0
      %p123 = por %p121, %p122
      %p124 = scmp.ne.s32.totalorder %s116, %s118
      %p125 = scmp.eq.s32.totalorder %s24, 1
      %p126 = por %p124, %p125
      %p127 = scmp.ne.s32.totalorder %s118, %s119
      %p128 = scmp.eq.s32.totalorder %s24, 0
      %p129 = por %p127, %p128
      %p130 = scmp.ne.s32.totalorder %s118, %s119
      %p131 = scmp.eq.s32.totalorder %s25, 1
      %p132 = por %p130, %p131
      %p134 = scmp.ne.s32.totalorder %s119, %s133
      %p135 = scmp.eq.s32.totalorder %s25, 0
      %p136 = por %p134, %p135
      %s137 = ssub.s32 %s19, %s26
      %p138 = scmp.eq.s32.totalorder %s137, 0
      %s140 = sadd.s32 %s139, 1
      %s141 = scalar_select %p138, %s139, %s140
      %p144 = pneg %p138
      %p145 = scmp.eq.s32.totalorder %s19, 1
      %p146 = por %p144, %p145
      %p147 = scmp.ne.s32.totalorder %s139, %s142
      %p148 = scmp.eq.s32.totalorder %s19, 0
      %p149 = por %p147, %p148
      %p150 = scmp.ne.s32.totalorder %s139, %s142
      %p151 = scmp.eq.s32.totalorder %s24, 1
      %p152 = por %p150, %p151
      %p153 = scmp.ne.s32.totalorder %s142, %s143
      %p154 = scmp.eq.s32.totalorder %s24, 0
      %p155 = por %p153, %p154
      %p156 = scmp.ne.s32.totalorder %s142, %s143
      %p157 = scmp.eq.s32.totalorder %s25, 1
      %p158 = por %p156, %p157
      %p160 = scmp.ne.s32.totalorder %s143, %s159
      %p161 = scmp.eq.s32.totalorder %s25, 0
      %p162 = por %p160, %p161
      %p163 = scmp.le.s32.totalorder 1, %s19
      %p164 = scmp.lt.s32.totalorder %s19, 3
      %p165 = pnand %p163, %p164
      %p166 = pneg %p165
      // Predicated region
      $region9: #{pixtral_attention.1} parent=5 // pred_check
        _
      $region10: #{pixtral_attention.1} parent=5 // pred_check_branch
        %168 = sbr.rel (%p165) target = $region12
      $region11: #{pixtral_attention.1} parent=5 // pred_region
        %s169 = ssub.s32 %s19, 1
        // Predicated region
        $region13: #{pixtral_attention.1} parent=11 // pred_check
          %p170 = pneg %p66
        $region14: #{pixtral_attention.1} parent=11 // pred_check_branch
          %172 = sbr.rel (%p170) target = $region16
        $region15: #{pixtral_attention.1} parent=11 // pred_region
          %174 = vsyncadd [#allocation6], 0
          %s175 = sshll.u32 %s1, 4
          %s176 = int_to_ptr.hbm [resolvable:$true] %s175
          %s177 = sshll.u32 [#allocation5], 4
          %s178 = int_to_ptr.vmem [resolvable:$true] %s177
          %183 = dma.hbm_to_vmem [thread:$0]  %s176, 512, %s178, [#allocation6], 128, 128, 8
        $region16: #{pixtral_attention.1} parent=11 // pred_fallthru
          _
        // Predicated region
        $region17: #{pixtral_attention.1} parent=11 // pred_check
          %p184 = pneg %p87
        $region18: #{pixtral_attention.1} parent=11 // pred_check_branch
          %186 = sbr.rel (%p184) target = $region20
        $region19: #{pixtral_attention.1} parent=11 // pred_region
          %188 = vsyncadd [#allocation6], 0
          %s189 = sshll.u32 %s2, 4
          %s190 = int_to_ptr.hbm [resolvable:$true] %s189
          %s191 = sshll.u32 [#allocation7], 4
          %s192 = int_to_ptr.vmem [resolvable:$true] %s191
          %197 = dma.hbm_to_vmem [thread:$0]  %s190, 512, %s192, [#allocation6], 128, 128, 8
        $region20: #{pixtral_attention.1} parent=11 // pred_fallthru
          _
        // Predicated region
        $region21: #{pixtral_attention.1} parent=11 // pred_check
          %p198 = pneg %p108
        $region22: #{pixtral_attention.1} parent=11 // pred_check_branch
          %200 = sbr.rel (%p198) target = $region24
        $region23: #{pixtral_attention.1} parent=11 // pred_region
          %202 = vsyncadd [#allocation9], 0
          %s204 = sshll.u32 %s3, 4
          %s205 = int_to_ptr.hbm [resolvable:$true] %s204
          %s206 = sshll.u32 [#allocation8], 4
          %s207 = int_to_ptr.vmem [resolvable:$true] %s206
          %209 = dma.hbm_to_vmem [thread:$0]  %s205, 128, %s207, [#allocation9]
        $region24: #{pixtral_attention.1} parent=11 // pred_fallthru
          _
        // Predicated region
        $region25: #{pixtral_attention.1} parent=11 // pred_check
          %p210 = pneg %p129
        $region26: #{pixtral_attention.1} parent=11 // pred_check_branch
          %212 = sbr.rel (%p210) target = $region28
        $region27: #{pixtral_attention.1} parent=11 // pred_region
          %214 = vsyncadd [#allocation9], 0
          %s216 = sshll.u32 %s4, 4
          %s217 = int_to_ptr.hbm [resolvable:$true] %s216
          %s218 = sshll.u32 [#allocation10], 4
          %s219 = int_to_ptr.vmem [resolvable:$true] %s218
          %221 = dma.hbm_to_vmem [thread:$0]  %s217, 128, %s219, [#allocation9]
        $region28: #{pixtral_attention.1} parent=11 // pred_fallthru
          _
      $region12: #{pixtral_attention.1} parent=5 // pred_fallthru
        _
      %p222 = scmp.lt.s32.totalorder %s19, 2
      // Predicated region
      $region29: #{pixtral_attention.1} parent=5 // pred_check
        %p223 = pneg %p222
      $region30: #{pixtral_attention.1} parent=5 // pred_check_branch
        %225 = sbr.rel (%p223) target = $region32
      $region31: #{pixtral_attention.1} parent=5 // pred_region
        // Predicated region
        $region33: #{pixtral_attention.1} parent=31 // pred_check
          %p226 = pneg %p39
        $region34: #{pixtral_attention.1} parent=31 // pred_check_branch
          %228 = sbr.rel (%p226) target = $region36
        $region35: #{pixtral_attention.1} parent=31 // pred_region
          %s229 = sand.u32 %s29, 1
          %s230 = scalar_lea.sflag [#allocation3], %s229
          %s231 = sand.u32 %s29, 1
          %s232 = smul.addr %s231, 8
          %s233 = scalar_lea.vmem [#allocation2], %s232
          %235 = vsyncadd %s230, 0
          %s236 = smul.addr %s19, 8
          %s237 = scalar_lea.hbm %s0, %s236
          %s239 = sshll.u32 %s237, 4
          %s240 = int_to_ptr.hbm [resolvable:$true] %s239
          %s241 = sshll.u32 %s233, 4
          %s242 = int_to_ptr.vmem [resolvable:$true] %s241
          %244 = dma.hbm_to_vmem [thread:$0]  %s240, 128, %s242, %s230
        $region36: #{pixtral_attention.1} parent=31 // pred_fallthru
          _
      $region32: #{pixtral_attention.1} parent=5 // pred_fallthru
        _
      %p245 = scmp.le.s32.totalorder 1, %s19
      %p246 = scmp.lt.s32.totalorder %s19, 3
      %p247 = pnand %p245, %p246
      %p248 = pneg %p247
      // Predicated region
      $region37: #{pixtral_attention.1} parent=5 // pred_check
        _
      $region38: #{pixtral_attention.1} parent=5 // pred_check_branch
        %250 = sbr.rel (%p247) target = $region40
      $region39: #{pixtral_attention.1} parent=5 // pred_region
        %s251 = ssub.s32 %s19, 1
        %s252 = sand.u32 %s32, 1
        %s253 = scalar_lea.sflag [#allocation3], %s252
        %s254 = sand.u32 %s32, 1
        %s255 = smul.addr %s254, 8
        %s256 = scalar_lea.vmem [#allocation2], %s255
        // Predicated region
        $region41: #{pixtral_attention.1} parent=39 // pred_check
          %p257 = pneg %p45
        $region42: #{pixtral_attention.1} parent=39 // pred_check_branch
          %259 = sbr.rel (%p257) target = $region44
        $region43: #{pixtral_attention.1} parent=39 // pred_region
          %261 = dma.done %s253, 128
        $region44: #{pixtral_attention.1} parent=39 // pred_fallthru
          _
        // Predicated region
        $region45: #{pixtral_attention.1} parent=39 // pred_check
          %p262 = pneg %p66
        $region46: #{pixtral_attention.1} parent=39 // pred_check_branch
          %264 = sbr.rel (%p262) target = $region48
        $region47: #{pixtral_attention.1} parent=39 // pred_region
          %266 = dma.done [#allocation6], 512
        $region48: #{pixtral_attention.1} parent=39 // pred_fallthru
          _
        // Predicated region
        $region49: #{pixtral_attention.1} parent=39 // pred_check
          %p267 = pneg %p87
        $region50: #{pixtral_attention.1} parent=39 // pred_check_branch
          %269 = sbr.rel (%p267) target = $region52
        $region51: #{pixtral_attention.1} parent=39 // pred_region
          %271 = dma.done [#allocation6], 512
        $region52: #{pixtral_attention.1} parent=39 // pred_fallthru
          _
        // Predicated region
        $region53: #{pixtral_attention.1} parent=39 // pred_check
          %p272 = pneg %p108
        $region54: #{pixtral_attention.1} parent=39 // pred_check_branch
          %274 = sbr.rel (%p272) target = $region56
        $region55: #{pixtral_attention.1} parent=39 // pred_region
          %276 = dma.done [#allocation9], 128
        $region56: #{pixtral_attention.1} parent=39 // pred_fallthru
          _
        // Predicated region
        $region57: #{pixtral_attention.1} parent=39 // pred_check
          %p277 = pneg %p129
        $region58: #{pixtral_attention.1} parent=39 // pred_check_branch
          %279 = sbr.rel (%p277) target = $region60
        $region59: #{pixtral_attention.1} parent=39 // pred_region
          %281 = dma.done [#allocation9], 128
        $region60: #{pixtral_attention.1} parent=39 // pred_fallthru
          _
        %s282 = sand.u32 %s32, 1
        %s283 = scalar_lea.sflag [#allocation3], %s282
        %s284 = sand.u32 %s32, 1
        %s285 = smul.addr %s284, 8
        %s286 = scalar_lea.vmem [#allocation2], %s285
        %p287 = pneg %p45
        %p288 = pneg %p42
        %p289 = pneg %p66
        %p290 = pneg %p63
        %p291 = pneg %p87
        %p292 = pneg %p84
        %p293 = pneg %p108
        %p294 = pneg %p105
        %p295 = pneg %p129
        %p296 = pneg %p126
        %p297 = pneg %p155
        %p298 = pneg %p152
        %s299 = sand.u32 %s142, 1
        %s300 = scalar_lea.sflag [#allocation4], %s299
        %s301 = sand.u32 %s142, 1
        %s302 = smul.addr %s301, 8
        %s303 = scalar_lea.vmem [#allocation11], %s302
        %v304 = vld [vmem:[%s256] sm:$0xff]
        %v305 = vld [vmem:[#allocation5] sm:$0xff]
        %v306 = vld [vmem:[#allocation5 + $0x8] sm:$0xff]
        %v307 = vld [vmem:[#allocation5 + $0x10] sm:$0xff]
        %v308 = vld [vmem:[#allocation5 + $0x18] sm:$0xff]
        %vm309 = vcmask 261120
        %v311 = vsel %vm309, %v304, 0
        %313 = vmatpush.msra.mxu0 0.0
        %314 = vmatpush.msra.mxu0 0.0
        %315 = vmatpush.msra.mxu0 0.0
        %316 = vmatpush.msra.mxu0 0.0
        %317 = vmatpush.msra.mxu0 0.0
        %318 = vmatpush.msra.mxu0 0.0
        %319 = vmatpush.msra.mxu0 0.0
        %320 = vmatpush.msra.mxu0 0.0
        %321 = vmatpush.msra.mxu0 0.0
        %322 = vmatpush.msra.mxu0 0.0
        %323 = vmatpush.msra.mxu0 0.0
        %324 = vmatpush.msra.mxu0 0.0
        %v325 = vand.u32 %v308, 4294901760
        %326 = vmatpush.msra.mxu0 %v325
        %v327 = vand.u32 %v307, 4294901760
        %328 = vmatpush.msra.mxu0 %v327
        %v329 = vand.u32 %v306, 4294901760
        %330 = vmatpush.msra.mxu0 %v329
        %v331 = vand.u32 %v305, 4294901760
        %332 = vmatpush.msra.mxu0 %v331
        %v333 = vand.u32 %v311, 4294901760
        %v334 = vsub.f32 %v311, %v333
        %v335 = vand.u32 %v334, 4294901760
        %v336 = vsub.f32 %v334, %v335
        %v337 = vand.u32 %v336, 4294901760
        %338 = vmatmul.f32.gmra.mxu0 %v337
        %v339 = vpop.f32.mrf.mxu0
        %v340 = vadd.f32 0.0, %v339
        %341 = vdwg.mxu0
        %342 = vmatpush.msra.mxu0 0.0
        %343 = vmatpush.msra.mxu0 0.0
        %344 = vmatpush.msra.mxu0 0.0
        %345 = vmatpush.msra.mxu0 0.0
        %346 = vmatpush.msra.mxu0 0.0
        %347 = vmatpush.msra.mxu0 0.0
        %348 = vmatpush.msra.mxu0 0.0
        %349 = vmatpush.msra.mxu0 0.0
        %350 = vmatpush.msra.mxu0 0.0
        %351 = vmatpush.msra.mxu0 0.0
        %352 = vmatpush.msra.mxu0 0.0
        %353 = vmatpush.msra.mxu0 0.0
        %v354 = vand.u32 %v308, 4294901760
        %v355 = vsub.f32 %v308, %v354
        %v356 = vand.u32 %v355, 4294901760
        %v357 = vsub.f32 %v355, %v356
        %v358 = vand.u32 %v357, 4294901760
        %359 = vmatpush.msra.mxu0 %v358
        %v360 = vand.u32 %v307, 4294901760
        %v361 = vsub.f32 %v307, %v360
        %v362 = vand.u32 %v361, 4294901760
        %v363 = vsub.f32 %v361, %v362
        %v364 = vand.u32 %v363, 4294901760
        %365 = vmatpush.msra.mxu0 %v364
        %v366 = vand.u32 %v306, 4294901760
        %v367 = vsub.f32 %v306, %v366
        %v368 = vand.u32 %v367, 4294901760
        %v369 = vsub.f32 %v367, %v368
        %v370 = vand.u32 %v369, 4294901760
        %371 = vmatpush.msra.mxu0 %v370
        %v372 = vand.u32 %v305, 4294901760
        %v373 = vsub.f32 %v305, %v372
        %v374 = vand.u32 %v373, 4294901760
        %v375 = vsub.f32 %v373, %v374
        %v376 = vand.u32 %v375, 4294901760
        %377 = vmatpush.msra.mxu0 %v376
        %v378 = vand.u32 %v311, 4294901760
        %379 = vmatmul.f32.gmra.mxu0 %v378
        %v380 = vpop.f32.mrf.mxu0
        %v381 = vadd.f32 %v340, %v380
        %382 = vdwg.mxu0
        %383 = vmatpush.msra.mxu0 0.0
        %384 = vmatpush.msra.mxu0 0.0
        %385 = vmatpush.msra.mxu0 0.0
        %386 = vmatpush.msra.mxu0 0.0
        %387 = vmatpush.msra.mxu0 0.0
        %388 = vmatpush.msra.mxu0 0.0
        %389 = vmatpush.msra.mxu0 0.0
        %390 = vmatpush.msra.mxu0 0.0
        %391 = vmatpush.msra.mxu0 0.0
        %392 = vmatpush.msra.mxu0 0.0
        %393 = vmatpush.msra.mxu0 0.0
        %394 = vmatpush.msra.mxu0 0.0
        %v395 = vand.u32 %v308, 4294901760
        %v396 = vsub.f32 %v308, %v395
        %397 = vmatpush.msra.mxu0 %v396
        %v398 = vand.u32 %v307, 4294901760
        %v399 = vsub.f32 %v307, %v398
        %400 = vmatpush.msra.mxu0 %v399
        %v401 = vand.u32 %v306, 4294901760
        %v402 = vsub.f32 %v306, %v401
        %403 = vmatpush.msra.mxu0 %v402
        %v404 = vand.u32 %v305, 4294901760
        %v405 = vsub.f32 %v305, %v404
        %406 = vmatpush.msra.mxu0 %v405
        %v407 = vand.u32 %v311, 4294901760
        %v408 = vsub.f32 %v311, %v407
        %409 = vmatmul.f32.gmra.mxu0 %v408
        %v410 = vpop.f32.mrf.mxu0
        %v411 = vadd.f32 %v381, %v410
        %412 = vdwg.mxu0
        %413 = vmatpush.msra.mxu0 0.0
        %414 = vmatpush.msra.mxu0 0.0
        %415 = vmatpush.msra.mxu0 0.0
        %416 = vmatpush.msra.mxu0 0.0
        %417 = vmatpush.msra.mxu0 0.0
        %418 = vmatpush.msra.mxu0 0.0
        %419 = vmatpush.msra.mxu0 0.0
        %420 = vmatpush.msra.mxu0 0.0
        %421 = vmatpush.msra.mxu0 0.0
        %422 = vmatpush.msra.mxu0 0.0
        %423 = vmatpush.msra.mxu0 0.0
        %424 = vmatpush.msra.mxu0 0.0
        %v425 = vand.u32 %v308, 4294901760
        %426 = vmatpush.msra.mxu0 %v425
        %v427 = vand.u32 %v307, 4294901760
        %428 = vmatpush.msra.mxu0 %v427
        %v429 = vand.u32 %v306, 4294901760
        %430 = vmatpush.msra.mxu0 %v429
        %v431 = vand.u32 %v305, 4294901760
        %432 = vmatpush.msra.mxu0 %v431
        %v433 = vand.u32 %v311, 4294901760
        %v434 = vsub.f32 %v311, %v433
        %v435 = vand.u32 %v434, 4294901760
        %436 = vmatmul.f32.gmra.mxu0 %v435
        %v437 = vpop.f32.mrf.mxu0
        %v438 = vadd.f32 %v411, %v437
        %439 = vdwg.mxu0
        %440 = vmatpush.msra.mxu0 0.0
        %441 = vmatpush.msra.mxu0 0.0
        %442 = vmatpush.msra.mxu0 0.0
        %443 = vmatpush.msra.mxu0 0.0
        %444 = vmatpush.msra.mxu0 0.0
        %445 = vmatpush.msra.mxu0 0.0
        %446 = vmatpush.msra.mxu0 0.0
        %447 = vmatpush.msra.mxu0 0.0
        %448 = vmatpush.msra.mxu0 0.0
        %449 = vmatpush.msra.mxu0 0.0
        %450 = vmatpush.msra.mxu0 0.0
        %451 = vmatpush.msra.mxu0 0.0
        %v452 = vand.u32 %v308, 4294901760
        %v453 = vsub.f32 %v308, %v452
        %v454 = vand.u32 %v453, 4294901760
        %455 = vmatpush.msra.mxu0 %v454
        %v456 = vand.u32 %v307, 4294901760
        %v457 = vsub.f32 %v307, %v456
        %v458 = vand.u32 %v457, 4294901760
        %459 = vmatpush.msra.mxu0 %v458
        %v460 = vand.u32 %v306, 4294901760
        %v461 = vsub.f32 %v306, %v460
        %v462 = vand.u32 %v461, 4294901760
        %463 = vmatpush.msra.mxu0 %v462
        %v464 = vand.u32 %v305, 4294901760
        %v465 = vsub.f32 %v305, %v464
        %v466 = vand.u32 %v465, 4294901760
        %467 = vmatpush.msra.mxu0 %v466
        %v468 = vand.u32 %v311, 4294901760
        %469 = vmatmul.f32.gmra.mxu0 %v468
        %v470 = vpop.f32.mrf.mxu0
        %v471 = vadd.f32 %v438, %v470
        %472 = vdwg.mxu0
        %473 = vmatpush.msra.mxu0 0.0
        %474 = vmatpush.msra.mxu0 0.0
        %475 = vmatpush.msra.mxu0 0.0
        %476 = vmatpush.msra.mxu0 0.0
        %477 = vmatpush.msra.mxu0 0.0
        %478 = vmatpush.msra.mxu0 0.0
        %479 = vmatpush.msra.mxu0 0.0
        %480 = vmatpush.msra.mxu0 0.0
        %481 = vmatpush.msra.mxu0 0.0
        %482 = vmatpush.msra.mxu0 0.0
        %483 = vmatpush.msra.mxu0 0.0
        %484 = vmatpush.msra.mxu0 0.0
        %v485 = vand.u32 %v308, 4294901760
        %486 = vmatpush.msra.mxu0 %v485
        %v487 = vand.u32 %v307, 4294901760
        %488 = vmatpush.msra.mxu0 %v487
        %v489 = vand.u32 %v306, 4294901760
        %490 = vmatpush.msra.mxu0 %v489
        %v491 = vand.u32 %v305, 4294901760
        %492 = vmatpush.msra.mxu0 %v491
        %v493 = vand.u32 %v311, 4294901760
        %494 = vmatmul.f32.gmra.mxu0 %v493
        %v495 = vpop.f32.mrf.mxu0
        %v496 = vadd.f32 %v471, %v495
        %497 = vdwg.mxu0
        %v498 = vld [vmem:[#allocation8] sm:$0xff]
        %v499 = vld [vmem:[#allocation10] sm:$0xff]
        %v500 = vsub.f32 0.0, %v496
        %502 = vrot.lane.b32.xlu0 %v500, 124
        %v503 = vpop.permute.xlu0 %502
        %506 = vrot.lane.b32.xlu0 %v496, 4
        %v507 = vpop.permute.xlu0 %506
        %vm509 = vcmask 31744
        %v510 = vsel %vm509, %v503, %v507
        %v511 = vmul.f32 %v496, %v498
        %v512 = vmul.f32 %v510, %v499
        %v513 = vadd.f32 %v511, %v512
        %v514 = vmul.f32 %v513, 0.35355338
        %515 = vrot.lane.b32.xlu0 %v500, 92
        %v516 = vpop.permute.xlu0 %515
        %518 = vrot.lane.b32.xlu0 %v496, 100
        %v519 = vpop.permute.xlu0 %518
        %v521 = vsel %vm509, %v516, %v519
        %523 = vrot.lane.b32.xlu0 %v498, 32
        %v524 = vpop.permute.xlu0 %523
        %v526 = vmul.f32 %v496, %v524
        %v527 = vmul.f32 %v521, %v499
        %529 = vrot.lane.b32.xlu0 %v527, 32
        %v530 = vpop.permute.xlu0 %529
        %v532 = vadd.f32 %v526, %v530
        %534 = vrot.lane.b32.xlu0 %v532, 96
        %v535 = vpop.permute.xlu0 %534
        %vm536 = vcmask 64512
        %v538 = vsel %vm536, %v514, 0
        %v540 = vsel %vm536, %v535, 0
        %542 = vmatpush.xpose.msra.mxu0 0.0
        %543 = vmatpush.xpose.msra.mxu0 0.0
        %544 = vmatpush.xpose.msra.mxu0 0.0
        %545 = vmatpush.xpose.msra.mxu0 0.0
        %546 = vmatpush.xpose.msra.mxu0 0.0
        %547 = vmatpush.xpose.msra.mxu0 0.0
        %548 = vmatpush.xpose.msra.mxu0 0.0
        %549 = vmatpush.xpose.msra.mxu0 0.0
        %550 = vmatpush.xpose.msra.mxu0 0.0
        %551 = vmatpush.xpose.msra.mxu0 0.0
        %552 = vmatpush.xpose.msra.mxu0 0.0
        %553 = vmatpush.xpose.msra.mxu0 0.0
        %554 = vmatpush.xpose.msra.mxu0 0.0
        %555 = vmatpush.xpose.msra.mxu0 0.0
        %556 = vmatpush.xpose.msra.mxu0 0.0
        %v557 = vand.u32 %v540, 4294901760
        %558 = vmatpush.xpose.msra.mxu0 %v557
        %v559 = vand.u32 %v538, 4294901760
        %v560 = vsub.f32 %v538, %v559
        %v561 = vand.u32 %v560, 4294901760
        %v562 = vsub.f32 %v560, %v561
        %v563 = vand.u32 %v562, 4294901760
        %564 = vmatmul.f32.gmra.mxu0 %v563
        %v565 = vpop.f32.mrf.mxu0
        %v566 = vadd.f32 0.0, %v565
        %567 = vdwg.mxu0
        %568 = vmatpush.xpose.msra.mxu0 0.0
        %569 = vmatpush.xpose.msra.mxu0 0.0
        %570 = vmatpush.xpose.msra.mxu0 0.0
        %571 = vmatpush.xpose.msra.mxu0 0.0
        %572 = vmatpush.xpose.msra.mxu0 0.0
        %573 = vmatpush.xpose.msra.mxu0 0.0
        %574 = vmatpush.xpose.msra.mxu0 0.0
        %575 = vmatpush.xpose.msra.mxu0 0.0
        %576 = vmatpush.xpose.msra.mxu0 0.0
        %577 = vmatpush.xpose.msra.mxu0 0.0
        %578 = vmatpush.xpose.msra.mxu0 0.0
        %579 = vmatpush.xpose.msra.mxu0 0.0
        %580 = vmatpush.xpose.msra.mxu0 0.0
        %581 = vmatpush.xpose.msra.mxu0 0.0
        %582 = vmatpush.xpose.msra.mxu0 0.0
        %v583 = vand.u32 %v540, 4294901760
        %v584 = vsub.f32 %v540, %v583
        %v585 = vand.u32 %v584, 4294901760
        %v586 = vsub.f32 %v584, %v585
        %v587 = vand.u32 %v586, 4294901760
        %588 = vmatpush.xpose.msra.mxu0 %v587
        %v589 = vand.u32 %v538, 4294901760
        %590 = vmatmul.f32.gmra.mxu0 %v589
        %v591 = vpop.f32.mrf.mxu0
        %v592 = vadd.f32 %v566, %v591
        %593 = vdwg.mxu0
        %594 = vmatpush.xpose.msra.mxu0 0.0
        %595 = vmatpush.xpose.msra.mxu0 0.0
        %596 = vmatpush.xpose.msra.mxu0 0.0
        %597 = vmatpush.xpose.msra.mxu0 0.0
        %598 = vmatpush.xpose.msra.mxu0 0.0
        %599 = vmatpush.xpose.msra.mxu0 0.0
        %600 = vmatpush.xpose.msra.mxu0 0.0
        %601 = vmatpush.xpose.msra.mxu0 0.0
        %602 = vmatpush.xpose.msra.mxu0 0.0
        %603 = vmatpush.xpose.msra.mxu0 0.0
        %604 = vmatpush.xpose.msra.mxu0 0.0
        %605 = vmatpush.xpose.msra.mxu0 0.0
        %606 = vmatpush.xpose.msra.mxu0 0.0
        %607 = vmatpush.xpose.msra.mxu0 0.0
        %608 = vmatpush.xpose.msra.mxu0 0.0
        %v609 = vand.u32 %v540, 4294901760
        %v610 = vsub.f32 %v540, %v609
        %611 = vmatpush.xpose.msra.mxu0 %v610
        %v612 = vand.u32 %v538, 4294901760
        %v613 = vsub.f32 %v538, %v612
        %614 = vmatmul.f32.gmra.mxu0 %v613
        %v615 = vpop.f32.mrf.mxu0
        %v616 = vadd.f32 %v592, %v615
        %617 = vdwg.mxu0
        %618 = vmatpush.xpose.msra.mxu0 0.0
        %619 = vmatpush.xpose.msra.mxu0 0.0
        %620 = vmatpush.xpose.msra.mxu0 0.0
        %621 = vmatpush.xpose.msra.mxu0 0.0
        %622 = vmatpush.xpose.msra.mxu0 0.0
        %623 = vmatpush.xpose.msra.mxu0 0.0
        %624 = vmatpush.xpose.msra.mxu0 0.0
        %625 = vmatpush.xpose.msra.mxu0 0.0
        %626 = vmatpush.xpose.msra.mxu0 0.0
        %627 = vmatpush.xpose.msra.mxu0 0.0
        %628 = vmatpush.xpose.msra.mxu0 0.0
        %629 = vmatpush.xpose.msra.mxu0 0.0
        %630 = vmatpush.xpose.msra.mxu0 0.0
        %631 = vmatpush.xpose.msra.mxu0 0.0
        %632 = vmatpush.xpose.msra.mxu0 0.0
        %v633 = vand.u32 %v540, 4294901760
        %634 = vmatpush.xpose.msra.mxu0 %v633
        %v635 = vand.u32 %v538, 4294901760
        %v636 = vsub.f32 %v538, %v635
        %v637 = vand.u32 %v636, 4294901760
        %638 = vmatmul.f32.gmra.mxu0 %v637
        %v639 = vpop.f32.mrf.mxu0
        %v640 = vadd.f32 %v616, %v639
        %641 = vdwg.mxu0
        %642 = vmatpush.xpose.msra.mxu0 0.0
        %643 = vmatpush.xpose.msra.mxu0 0.0
        %644 = vmatpush.xpose.msra.mxu0 0.0
        %645 = vmatpush.xpose.msra.mxu0 0.0
        %646 = vmatpush.xpose.msra.mxu0 0.0
        %647 = vmatpush.xpose.msra.mxu0 0.0
        %648 = vmatpush.xpose.msra.mxu0 0.0
        %649 = vmatpush.xpose.msra.mxu0 0.0
        %650 = vmatpush.xpose.msra.mxu0 0.0
        %651 = vmatpush.xpose.msra.mxu0 0.0
        %652 = vmatpush.xpose.msra.mxu0 0.0
        %653 = vmatpush.xpose.msra.mxu0 0.0
        %654 = vmatpush.xpose.msra.mxu0 0.0
        %655 = vmatpush.xpose.msra.mxu0 0.0
        %656 = vmatpush.xpose.msra.mxu0 0.0
        %v657 = vand.u32 %v540, 4294901760
        %v658 = vsub.f32 %v540, %v657
        %v659 = vand.u32 %v658, 4294901760
        %660 = vmatpush.xpose.msra.mxu0 %v659
        %v661 = vand.u32 %v538, 4294901760
        %662 = vmatmul.f32.gmra.mxu0 %v661
        %v663 = vpop.f32.mrf.mxu0
        %v664 = vadd.f32 %v640, %v663
        %665 = vdwg.mxu0
        %666 = vmatpush.xpose.msra.mxu0 0.0
        %667 = vmatpush.xpose.msra.mxu0 0.0
        %668 = vmatpush.xpose.msra.mxu0 0.0
        %669 = vmatpush.xpose.msra.mxu0 0.0
        %670 = vmatpush.xpose.msra.mxu0 0.0
        %671 = vmatpush.xpose.msra.mxu0 0.0
        %672 = vmatpush.xpose.msra.mxu0 0.0
        %673 = vmatpush.xpose.msra.mxu0 0.0
        %674 = vmatpush.xpose.msra.mxu0 0.0
        %675 = vmatpush.xpose.msra.mxu0 0.0
        %676 = vmatpush.xpose.msra.mxu0 0.0
        %677 = vmatpush.xpose.msra.mxu0 0.0
        %678 = vmatpush.xpose.msra.mxu0 0.0
        %679 = vmatpush.xpose.msra.mxu0 0.0
        %680 = vmatpush.xpose.msra.mxu0 0.0
        %v681 = vand.u32 %v540, 4294901760
        %682 = vmatpush.xpose.msra.mxu0 %v681
        %v683 = vand.u32 %v538, 4294901760
        %684 = vmatmul.f32.gmra.mxu0 %v683
        %v685 = vpop.f32.mrf.mxu0
        %v686 = vadd.f32 %v664, %v685
        %687 = vdwg.mxu0
        %v688 = vsel %vm536, %v686, -inf
        %689 = vmax.xlane.f32.xlu0 %v688
        %v690 = vpop.xlane.xlu0 %689
        %v691 = vsub.f32 %v686, %v690
        %v692 = vmul.f32 %v691, 1.442695
        %v693 = vpow.pop %v692
        %v694 = vsel %vm536, %v693, 0.0
        %695 = vadd.xlane.f32.xlu0 %v694
        %v696 = vpop.xlane.xlu0 %695
        %v697 = vrcp.pop %v696
        %v698 = vmul.f32 %v696, %v697
        %v699 = vsub.f32 1.0, %v698
        %v700 = vmul.f32 %v697, %v699
        %v701 = vadd.f32 %v697, %v700
        %vm702 = vweird.f32 %v696
        %vm703 = vweird.f32 %v697
        %vm704 = vmor %vm702, %vm703
        %v705 = vsel %vm704, %v697, %v701
        %v706 = vand.u32 2147483647, %v696
        %vm707 = vcmp.eq.f32.partialorder %v706, 8.507059e+37
        %v708 = vand.u32 %v696, 2147483648
        %v709 = vor.u32 1.1754944e-38, %v708
        %v710 = vsel %vm707, %v709, %v705
        %v711 = vmul.f32 %v693, %v710
        %712 = vrot.lane.b32.xlu0 %v496, 64
        %v713 = vpop.permute.xlu0 %712
        %v716 = vsel %vm536, %v711, 0
        %718 = vmatpush.msra.mxu0 0.0
        %719 = vmatpush.msra.mxu0 0.0
        %720 = vmatpush.msra.mxu0 0.0
        %721 = vmatpush.msra.mxu0 0.0
        %722 = vmatpush.msra.mxu0 0.0
        %723 = vmatpush.msra.mxu0 0.0
        %724 = vmatpush.msra.mxu0 0.0
        %725 = vmatpush.msra.mxu0 0.0
        %726 = vmatpush.msra.mxu0 0.0
        %727 = vmatpush.msra.mxu0 0.0
        %728 = vmatpush.msra.mxu0 0.0
        %729 = vmatpush.msra.mxu0 0.0
        %730 = vmatpush.msra.mxu0 0.0
        %731 = vmatpush.msra.mxu0 0.0
        %732 = vmatpush.msra.mxu0 0.0
        %v733 = vand.u32 %v713, 4294901760
        %734 = vmatpush.msra.mxu0 %v733
        %v735 = vand.u32 %v716, 4294901760
        %v736 = vsub.f32 %v716, %v735
        %v737 = vand.u32 %v736, 4294901760
        %v738 = vsub.f32 %v736, %v737
        %v739 = vand.u32 %v738, 4294901760
        %740 = vmatmul.f32.gmra.mxu0 %v739
        %v741 = vpop.f32.mrf.mxu0
        %v742 = vadd.f32 0.0, %v741
        %743 = vdwg.mxu0
        %744 = vmatpush.msra.mxu0 0.0
        %745 = vmatpush.msra.mxu0 0.0
        %746 = vmatpush.msra.mxu0 0.0
        %747 = vmatpush.msra.mxu0 0.0
        %748 = vmatpush.msra.mxu0 0.0
        %749 = vmatpush.msra.mxu0 0.0
        %750 = vmatpush.msra.mxu0 0.0
        %751 = vmatpush.msra.mxu0 0.0
        %752 = vmatpush.msra.mxu0 0.0
        %753 = vmatpush.msra.mxu0 0.0
        %754 = vmatpush.msra.mxu0 0.0
        %755 = vmatpush.msra.mxu0 0.0
        %756 = vmatpush.msra.mxu0 0.0
        %757 = vmatpush.msra.mxu0 0.0
        %758 = vmatpush.msra.mxu0 0.0
        %v759 = vand.u32 %v713, 4294901760
        %v760 = vsub.f32 %v713, %v759
        %v761 = vand.u32 %v760, 4294901760
        %v762 = vsub.f32 %v760, %v761
        %v763 = vand.u32 %v762, 4294901760
        %764 = vmatpush.msra.mxu0 %v763
        %v765 = vand.u32 %v716, 4294901760
        %766 = vmatmul.f32.gmra.mxu0 %v765
        %v767 = vpop.f32.mrf.mxu0
        %v768 = vadd.f32 %v742, %v767
        %769 = vdwg.mxu0
        %770 = vmatpush.msra.mxu0 0.0
        %771 = vmatpush.msra.mxu0 0.0
        %772 = vmatpush.msra.mxu0 0.0
        %773 = vmatpush.msra.mxu0 0.0
        %774 = vmatpush.msra.mxu0 0.0
        %775 = vmatpush.msra.mxu0 0.0
        %776 = vmatpush.msra.mxu0 0.0
        %777 = vmatpush.msra.mxu0 0.0
        %778 = vmatpush.msra.mxu0 0.0
        %779 = vmatpush.msra.mxu0 0.0
        %780 = vmatpush.msra.mxu0 0.0
        %781 = vmatpush.msra.mxu0 0.0
        %782 = vmatpush.msra.mxu0 0.0
        %783 = vmatpush.msra.mxu0 0.0
        %784 = vmatpush.msra.mxu0 0.0
        %v785 = vand.u32 %v713, 4294901760
        %v786 = vsub.f32 %v713, %v785
        %787 = vmatpush.msra.mxu0 %v786
        %v788 = vand.u32 %v716, 4294901760
        %v789 = vsub.f32 %v716, %v788
        %790 = vmatmul.f32.gmra.mxu0 %v789
        %v791 = vpop.f32.mrf.mxu0
        %v792 = vadd.f32 %v768, %v791
        %793 = vdwg.mxu0
        %794 = vmatpush.msra.mxu0 0.0
        %795 = vmatpush.msra.mxu0 0.0
        %796 = vmatpush.msra.mxu0 0.0
        %797 = vmatpush.msra.mxu0 0.0
        %798 = vmatpush.msra.mxu0 0.0
        %799 = vmatpush.msra.mxu0 0.0
        %800 = vmatpush.msra.mxu0 0.0
        %801 = vmatpush.msra.mxu0 0.0
        %802 = vmatpush.msra.mxu0 0.0
        %803 = vmatpush.msra.mxu0 0.0
        %804 = vmatpush.msra.mxu0 0.0
        %805 = vmatpush.msra.mxu0 0.0
        %806 = vmatpush.msra.mxu0 0.0
        %807 = vmatpush.msra.mxu0 0.0
        %808 = vmatpush.msra.mxu0 0.0
        %v809 = vand.u32 %v713, 4294901760
        %810 = vmatpush.msra.mxu0 %v809
        %v811 = vand.u32 %v716, 4294901760
        %v812 = vsub.f32 %v716, %v811
        %v813 = vand.u32 %v812, 4294901760
        %814 = vmatmul.f32.gmra.mxu0 %v813
        %v815 = vpop.f32.mrf.mxu0
        %v816 = vadd.f32 %v792, %v815
        %817 = vdwg.mxu0
        %818 = vmatpush.msra.mxu0 0.0
        %819 = vmatpush.msra.mxu0 0.0
        %820 = vmatpush.msra.mxu0 0.0
        %821 = vmatpush.msra.mxu0 0.0
        %822 = vmatpush.msra.mxu0 0.0
        %823 = vmatpush.msra.mxu0 0.0
        %824 = vmatpush.msra.mxu0 0.0
        %825 = vmatpush.msra.mxu0 0.0
        %826 = vmatpush.msra.mxu0 0.0
        %827 = vmatpush.msra.mxu0 0.0
        %828 = vmatpush.msra.mxu0 0.0
        %829 = vmatpush.msra.mxu0 0.0
        %830 = vmatpush.msra.mxu0 0.0
        %831 = vmatpush.msra.mxu0 0.0
        %832 = vmatpush.msra.mxu0 0.0
        %v833 = vand.u32 %v713, 4294901760
        %v834 = vsub.f32 %v713, %v833
        %v835 = vand.u32 %v834, 4294901760
        %836 = vmatpush.msra.mxu0 %v835
        %v837 = vand.u32 %v716, 4294901760
        %838 = vmatmul.f32.gmra.mxu0 %v837
        %v839 = vpop.f32.mrf.mxu0
        %v840 = vadd.f32 %v816, %v839
        %841 = vdwg.mxu0
        %842 = vmatpush.msra.mxu0 0.0
        %843 = vmatpush.msra.mxu0 0.0
        %844 = vmatpush.msra.mxu0 0.0
        %845 = vmatpush.msra.mxu0 0.0
        %846 = vmatpush.msra.mxu0 0.0
        %847 = vmatpush.msra.mxu0 0.0
        %848 = vmatpush.msra.mxu0 0.0
        %849 = vmatpush.msra.mxu0 0.0
        %850 = vmatpush.msra.mxu0 0.0
        %851 = vmatpush.msra.mxu0 0.0
        %852 = vmatpush.msra.mxu0 0.0
        %853 = vmatpush.msra.mxu0 0.0
        %854 = vmatpush.msra.mxu0 0.0
        %855 = vmatpush.msra.mxu0 0.0
        %856 = vmatpush.msra.mxu0 0.0
        %v857 = vand.u32 %v713, 4294901760
        %858 = vmatpush.msra.mxu0 %v857
        %v859 = vand.u32 %v716, 4294901760
        %860 = vmatmul.f32.gmra.mxu0 %v859
        %v861 = vpop.f32.mrf.mxu0
        %v862 = vadd.f32 %v840, %v861
        %863 = vdwg.mxu0
        %864 = vrot.lane.b32.xlu0 %v500, 116
        %v865 = vpop.permute.xlu0 %864
        %867 = vrot.lane.b32.xlu0 %v496, 124
        %v868 = vpop.permute.xlu0 %867
        %v870 = vsel %vm509, %v865, %v868
        %871 = vrot.lane.b32.xlu0 %v498, 8
        %v872 = vpop.permute.xlu0 %871
        %v874 = vmul.f32 %v496, %v872
        %v875 = vmul.f32 %v870, %v499
        %877 = vrot.lane.b32.xlu0 %v875, 8
        %v878 = vpop.permute.xlu0 %877
        %v880 = vadd.f32 %v874, %v878
        %v881 = vmul.f32 %v880, 0.35355338
        %882 = vrot.lane.b32.xlu0 %v500, 84
        %v883 = vpop.permute.xlu0 %882
        %885 = vrot.lane.b32.xlu0 %v496, 92
        %v886 = vpop.permute.xlu0 %885
        %v888 = vsel %vm509, %v883, %v886
        %889 = vrot.lane.b32.xlu0 %v498, 40
        %v890 = vpop.permute.xlu0 %889
        %v892 = vmul.f32 %v496, %v890
        %v893 = vmul.f32 %v888, %v499
        %895 = vrot.lane.b32.xlu0 %v893, 40
        %v896 = vpop.permute.xlu0 %895
        %v898 = vadd.f32 %v892, %v896
        %900 = vrot.lane.b32.xlu0 %v881, 120
        %v901 = vpop.permute.xlu0 %900
        %903 = vrot.lane.b32.xlu0 %v898, 88
        %v904 = vpop.permute.xlu0 %903
        %v905 = vsel %vm536, %v901, 0
        %v907 = vsel %vm536, %v904, 0
        %909 = vmatpush.xpose.msra.mxu0 0.0
        %910 = vmatpush.xpose.msra.mxu0 0.0
        %911 = vmatpush.xpose.msra.mxu0 0.0
        %912 = vmatpush.xpose.msra.mxu0 0.0
        %913 = vmatpush.xpose.msra.mxu0 0.0
        %914 = vmatpush.xpose.msra.mxu0 0.0
        %915 = vmatpush.xpose.msra.mxu0 0.0
        %916 = vmatpush.xpose.msra.mxu0 0.0
        %917 = vmatpush.xpose.msra.mxu0 0.0
        %918 = vmatpush.xpose.msra.mxu0 0.0
        %919 = vmatpush.xpose.msra.mxu0 0.0
        %920 = vmatpush.xpose.msra.mxu0 0.0
        %921 = vmatpush.xpose.msra.mxu0 0.0
        %922 = vmatpush.xpose.msra.mxu0 0.0
        %923 = vmatpush.xpose.msra.mxu0 0.0
        %v924 = vand.u32 %v907, 4294901760
        %925 = vmatpush.xpose.msra.mxu0 %v924
        %v926 = vand.u32 %v905, 4294901760
        %v927 = vsub.f32 %v905, %v926
        %v928 = vand.u32 %v927, 4294901760
        %v929 = vsub.f32 %v927, %v928
        %v930 = vand.u32 %v929, 4294901760
        %931 = vmatmul.f32.gmra.mxu0 %v930
        %v932 = vpop.f32.mrf.mxu0
        %v933 = vadd.f32 0.0, %v932
        %934 = vdwg.mxu0
        %935 = vmatpush.xpose.msra.mxu0 0.0
        %936 = vmatpush.xpose.msra.mxu0 0.0
        %937 = vmatpush.xpose.msra.mxu0 0.0
        %938 = vmatpush.xpose.msra.mxu0 0.0
        %939 = vmatpush.xpose.msra.mxu0 0.0
        %940 = vmatpush.xpose.msra.mxu0 0.0
        %941 = vmatpush.xpose.msra.mxu0 0.0
        %942 = vmatpush.xpose.msra.mxu0 0.0
        %943 = vmatpush.xpose.msra.mxu0 0.0
        %944 = vmatpush.xpose.msra.mxu0 0.0
        %945 = vmatpush.xpose.msra.mxu0 0.0
        %946 = vmatpush.xpose.msra.mxu0 0.0
        %947 = vmatpush.xpose.msra.mxu0 0.0
        %948 = vmatpush.xpose.msra.mxu0 0.0
        %949 = vmatpush.xpose.msra.mxu0 0.0
        %v950 = vand.u32 %v907, 4294901760
        %v951 = vsub.f32 %v907, %v950
        %v952 = vand.u32 %v951, 4294901760
        %v953 = vsub.f32 %v951, %v952
        %v954 = vand.u32 %v953, 4294901760
        %955 = vmatpush.xpose.msra.mxu0 %v954
        %v956 = vand.u32 %v905, 4294901760
        %957 = vmatmul.f32.gmra.mxu0 %v956
        %v958 = vpop.f32.mrf.mxu0
        %v959 = vadd.f32 %v933, %v958
        %960 = vdwg.mxu0
        %961 = vmatpush.xpose.msra.mxu0 0.0
        %962 = vmatpush.xpose.msra.mxu0 0.0
        %963 = vmatpush.xpose.msra.mxu0 0.0
        %964 = vmatpush.xpose.msra.mxu0 0.0
        %965 = vmatpush.xpose.msra.mxu0 0.0
        %966 = vmatpush.xpose.msra.mxu0 0.0
        %967 = vmatpush.xpose.msra.mxu0 0.0
        %968 = vmatpush.xpose.msra.mxu0 0.0
        %969 = vmatpush.xpose.msra.mxu0 0.0
        %970 = vmatpush.xpose.msra.mxu0 0.0
        %971 = vmatpush.xpose.msra.mxu0 0.0
        %972 = vmatpush.xpose.msra.mxu0 0.0
        %973 = vmatpush.xpose.msra.mxu0 0.0
        %974 = vmatpush.xpose.msra.mxu0 0.0
        %975 = vmatpush.xpose.msra.mxu0 0.0
        %v976 = vand.u32 %v907, 4294901760
        %v977 = vsub.f32 %v907, %v976
        %978 = vmatpush.xpose.msra.mxu0 %v977
        %v979 = vand.u32 %v905, 4294901760
        %v980 = vsub.f32 %v905, %v979
        %981 = vmatmul.f32.gmra.mxu0 %v980
        %v982 = vpop.f32.mrf.mxu0
        %v983 = vadd.f32 %v959, %v982
        %984 = vdwg.mxu0
        %985 = vmatpush.xpose.msra.mxu0 0.0
        %986 = vmatpush.xpose.msra.mxu0 0.0
        %987 = vmatpush.xpose.msra.mxu0 0.0
        %988 = vmatpush.xpose.msra.mxu0 0.0
        %989 = vmatpush.xpose.msra.mxu0 0.0
        %990 = vmatpush.xpose.msra.mxu0 0.0
        %991 = vmatpush.xpose.msra.mxu0 0.0
        %992 = vmatpush.xpose.msra.mxu0 0.0
        %993 = vmatpush.xpose.msra.mxu0 0.0
        %994 = vmatpush.xpose.msra.mxu0 0.0
        %995 = vmatpush.xpose.msra.mxu0 0.0
        %996 = vmatpush.xpose.msra.mxu0 0.0
        %997 = vmatpush.xpose.msra.mxu0 0.0
        %998 = vmatpush.xpose.msra.mxu0 0.0
        %999 = vmatpush.xpose.msra.mxu0 0.0
        %v1000 = vand.u32 %v907, 4294901760
        %1001 = vmatpush.xpose.msra.mxu0 %v1000
        %v1002 = vand.u32 %v905, 4294901760
        %v1003 = vsub.f32 %v905, %v1002
        %v1004 = vand.u32 %v1003, 4294901760
        %1005 = vmatmul.f32.gmra.mxu0 %v1004
        %v1006 = vpop.f32.mrf.mxu0
        %v1007 = vadd.f32 %v983, %v1006
        %1008 = vdwg.mxu0
        %1009 = vmatpush.xpose.msra.mxu0 0.0
        %1010 = vmatpush.xpose.msra.mxu0 0.0
        %1011 = vmatpush.xpose.msra.mxu0 0.0
        %1012 = vmatpush.xpose.msra.mxu0 0.0
        %1013 = vmatpush.xpose.msra.mxu0 0.0
        %1014 = vmatpush.xpose.msra.mxu0 0.0
        %1015 = vmatpush.xpose.msra.mxu0 0.0
        %1016 = vmatpush.xpose.msra.mxu0 0.0
        %1017 = vmatpush.xpose.msra.mxu0 0.0
        %1018 = vmatpush.xpose.msra.mxu0 0.0
        %1019 = vmatpush.xpose.msra.mxu0 0.0
        %1020 = vmatpush.xpose.msra.mxu0 0.0
        %1021 = vmatpush.xpose.msra.mxu0 0.0
        %1022 = vmatpush.xpose.msra.mxu0 0.0
        %1023 = vmatpush.xpose.msra.mxu0 0.0
        %v1024 = vand.u32 %v907, 4294901760
        %v1025 = vsub.f32 %v907, %v1024
        %v1026 = vand.u32 %v1025, 4294901760
        %1027 = vmatpush.xpose.msra.mxu0 %v1026
        %v1028 = vand.u32 %v905, 4294901760
        %1029 = vmatmul.f32.gmra.mxu0 %v1028
        %v1030 = vpop.f32.mrf.mxu0
        %v1031 = vadd.f32 %v1007, %v1030
        %1032 = vdwg.mxu0
        %1033 = vmatpush.xpose.msra.mxu0 0.0
        %1034 = vmatpush.xpose.msra.mxu0 0.0
        %1035 = vmatpush.xpose.msra.mxu0 0.0
        %1036 = vmatpush.xpose.msra.mxu0 0.0
        %1037 = vmatpush.xpose.msra.mxu0 0.0
        %1038 = vmatpush.xpose.msra.mxu0 0.0
        %1039 = vmatpush.xpose.msra.mxu0 0.0
        %1040 = vmatpush.xpose.msra.mxu0 0.0
        %1041 = vmatpush.xpose.msra.mxu0 0.0
        %1042 = vmatpush.xpose.msra.mxu0 0.0
        %1043 = vmatpush.xpose.msra.mxu0 0.0
        %1044 = vmatpush.xpose.msra.mxu0 0.0
        %1045 = vmatpush.xpose.msra.mxu0 0.0
        %1046 = vmatpush.xpose.msra.mxu0 0.0
        %1047 = vmatpush.xpose.msra.mxu0 0.0
        %v1048 = vand.u32 %v907, 4294901760
        %1049 = vmatpush.xpose.msra.mxu0 %v1048
        %v1050 = vand.u32 %v905, 4294901760
        %1051 = vmatmul.f32.gmra.mxu0 %v1050
        %v1052 = vpop.f32.mrf.mxu0
        %v1053 = vadd.f32 %v1031, %v1052
        %1054 = vdwg.mxu0
        %v1055 = vsel %vm536, %v1053, -inf
        %1056 = vmax.xlane.f32.xlu0 %v1055
        %v1057 = vpop.xlane.xlu0 %1056
        %v1058 = vsub.f32 %v1053, %v1057
        %v1059 = vmul.f32 %v1058, 1.442695
        %v1060 = vpow.pop %v1059
        %v1061 = vsel %vm536, %v1060, 0.0
        %1062 = vadd.xlane.f32.xlu0 %v1061
        %v1063 = vpop.xlane.xlu0 %1062
        %v1064 = vrcp.pop %v1063
        %v1065 = vmul.f32 %v1063, %v1064
        %v1066 = vsub.f32 1.0, %v1065
        %v1067 = vmul.f32 %v1064, %v1066
        %v1068 = vadd.f32 %v1064, %v1067
        %vm1069 = vweird.f32 %v1063
        %vm1070 = vweird.f32 %v1064
        %vm1071 = vmor %vm1069, %vm1070
        %v1072 = vsel %vm1071, %v1064, %v1068
        %v1073 = vand.u32 2147483647, %v1063
        %vm1074 = vcmp.eq.f32.partialorder %v1073, 8.507059e+37
        %v1075 = vand.u32 %v1063, 2147483648
        %v1076 = vor.u32 1.1754944e-38, %v1075
        %v1077 = vsel %vm1074, %v1076, %v1072
        %v1078 = vmul.f32 %v1060, %v1077
        %1079 = vrot.lane.b32.xlu0 %v496, 56
        %v1080 = vpop.permute.xlu0 %1079
        %v1083 = vsel %vm536, %v1078, 0
        %1085 = vmatpush.msra.mxu0 0.0
        %1086 = vmatpush.msra.mxu0 0.0
        %1087 = vmatpush.msra.mxu0 0.0
        %1088 = vmatpush.msra.mxu0 0.0
        %1089 = vmatpush.msra.mxu0 0.0
        %1090 = vmatpush.msra.mxu0 0.0
        %1091 = vmatpush.msra.mxu0 0.0
        %1092 = vmatpush.msra.mxu0 0.0
        %1093 = vmatpush.msra.mxu0 0.0
        %1094 = vmatpush.msra.mxu0 0.0
        %1095 = vmatpush.msra.mxu0 0.0
        %1096 = vmatpush.msra.mxu0 0.0
        %1097 = vmatpush.msra.mxu0 0.0
        %1098 = vmatpush.msra.mxu0 0.0
        %1099 = vmatpush.msra.mxu0 0.0
        %v1100 = vand.u32 %v1080, 4294901760
        %1101 = vmatpush.msra.mxu0 %v1100
        %v1102 = vand.u32 %v1083, 4294901760
        %v1103 = vsub.f32 %v1083, %v1102
        %v1104 = vand.u32 %v1103, 4294901760
        %v1105 = vsub.f32 %v1103, %v1104
        %v1106 = vand.u32 %v1105, 4294901760
        %1107 = vmatmul.f32.gmra.mxu0 %v1106
        %v1108 = vpop.f32.mrf.mxu0
        %v1109 = vadd.f32 0.0, %v1108
        %1110 = vdwg.mxu0
        %1111 = vmatpush.msra.mxu0 0.0
        %1112 = vmatpush.msra.mxu0 0.0
        %1113 = vmatpush.msra.mxu0 0.0
        %1114 = vmatpush.msra.mxu0 0.0
        %1115 = vmatpush.msra.mxu0 0.0
        %1116 = vmatpush.msra.mxu0 0.0
        %1117 = vmatpush.msra.mxu0 0.0
        %1118 = vmatpush.msra.mxu0 0.0
        %1119 = vmatpush.msra.mxu0 0.0
        %1120 = vmatpush.msra.mxu0 0.0
        %1121 = vmatpush.msra.mxu0 0.0
        %1122 = vmatpush.msra.mxu0 0.0
        %1123 = vmatpush.msra.mxu0 0.0
        %1124 = vmatpush.msra.mxu0 0.0
        %1125 = vmatpush.msra.mxu0 0.0
        %v1126 = vand.u32 %v1080, 4294901760
        %v1127 = vsub.f32 %v1080, %v1126
        %v1128 = vand.u32 %v1127, 4294901760
        %v1129 = vsub.f32 %v1127, %v1128
        %v1130 = vand.u32 %v1129, 4294901760
        %1131 = vmatpush.msra.mxu0 %v1130
        %v1132 = vand.u32 %v1083, 4294901760
        %1133 = vmatmul.f32.gmra.mxu0 %v1132
        %v1134 = vpop.f32.mrf.mxu0
        %v1135 = vadd.f32 %v1109, %v1134
        %1136 = vdwg.mxu0
        %1137 = vmatpush.msra.mxu0 0.0
        %1138 = vmatpush.msra.mxu0 0.0
        %1139 = vmatpush.msra.mxu0 0.0
        %1140 = vmatpush.msra.mxu0 0.0
        %1141 = vmatpush.msra.mxu0 0.0
        %1142 = vmatpush.msra.mxu0 0.0
        %1143 = vmatpush.msra.mxu0 0.0
        %1144 = vmatpush.msra.mxu0 0.0
        %1145 = vmatpush.msra.mxu0 0.0
        %1146 = vmatpush.msra.mxu0 0.0
        %1147 = vmatpush.msra.mxu0 0.0
        %1148 = vmatpush.msra.mxu0 0.0
        %1149 = vmatpush.msra.mxu0 0.0
        %1150 = vmatpush.msra.mxu0 0.0
        %1151 = vmatpush.msra.mxu0 0.0
        %v1152 = vand.u32 %v1080, 4294901760
        %v1153 = vsub.f32 %v1080, %v1152
        %1154 = vmatpush.msra.mxu0 %v1153
        %v1155 = vand.u32 %v1083, 4294901760
        %v1156 = vsub.f32 %v1083, %v1155
        %1157 = vmatmul.f32.gmra.mxu0 %v1156
        %v1158 = vpop.f32.mrf.mxu0
        %v1159 = vadd.f32 %v1135, %v1158
        %1160 = vdwg.mxu0
        %1161 = vmatpush.msra.mxu0 0.0
        %1162 = vmatpush.msra.mxu0 0.0
        %1163 = vmatpush.msra.mxu0 0.0
        %1164 = vmatpush.msra.mxu0 0.0
        %1165 = vmatpush.msra.mxu0 0.0
        %1166 = vmatpush.msra.mxu0 0.0
        %1167 = vmatpush.msra.mxu0 0.0
        %1168 = vmatpush.msra.mxu0 0.0
        %1169 = vmatpush.msra.mxu0 0.0
        %1170 = vmatpush.msra.mxu0 0.0
        %1171 = vmatpush.msra.mxu0 0.0
        %1172 = vmatpush.msra.mxu0 0.0
        %1173 = vmatpush.msra.mxu0 0.0
        %1174 = vmatpush.msra.mxu0 0.0
        %1175 = vmatpush.msra.mxu0 0.0
        %v1176 = vand.u32 %v1080, 4294901760
        %1177 = vmatpush.msra.mxu0 %v1176
        %v1178 = vand.u32 %v1083, 4294901760
        %v1179 = vsub.f32 %v1083, %v1178
        %v1180 = vand.u32 %v1179, 4294901760
        %1181 = vmatmul.f32.gmra.mxu0 %v1180
        %v1182 = vpop.f32.mrf.mxu0
        %v1183 = vadd.f32 %v1159, %v1182
        %1184 = vdwg.mxu0
        %1185 = vmatpush.msra.mxu0 0.0
        %1186 = vmatpush.msra.mxu0 0.0
        %1187 = vmatpush.msra.mxu0 0.0
        %1188 = vmatpush.msra.mxu0 0.0
        %1189 = vmatpush.msra.mxu0 0.0
        %1190 = vmatpush.msra.mxu0 0.0
        %1191 = vmatpush.msra.mxu0 0.0
        %1192 = vmatpush.msra.mxu0 0.0
        %1193 = vmatpush.msra.mxu0 0.0
        %1194 = vmatpush.msra.mxu0 0.0
        %1195 = vmatpush.msra.mxu0 0.0
        %1196 = vmatpush.msra.mxu0 0.0
        %1197 = vmatpush.msra.mxu0 0.0
        %1198 = vmatpush.msra.mxu0 0.0
        %1199 = vmatpush.msra.mxu0 0.0
        %v1200 = vand.u32 %v1080, 4294901760
        %v1201 = vsub.f32 %v1080, %v1200
        %v1202 = vand.u32 %v1201, 4294901760
        %1203 = vmatpush.msra.mxu0 %v1202
        %v1204 = vand.u32 %v1083, 4294901760
        %1205 = vmatmul.f32.gmra.mxu0 %v1204
        %v1206 = vpop.f32.mrf.mxu0
        %v1207 = vadd.f32 %v1183, %v1206
        %1208 = vdwg.mxu0
        %1209 = vmatpush.msra.mxu0 0.0
        %1210 = vmatpush.msra.mxu0 0.0
        %1211 = vmatpush.msra.mxu0 0.0
        %1212 = vmatpush.msra.mxu0 0.0
        %1213 = vmatpush.msra.mxu0 0.0
        %1214 = vmatpush.msra.mxu0 0.0
        %1215 = vmatpush.msra.mxu0 0.0
        %1216 = vmatpush.msra.mxu0 0.0
        %1217 = vmatpush.msra.mxu0 0.0
        %1218 = vmatpush.msra.mxu0 0.0
        %1219 = vmatpush.msra.mxu0 0.0
        %1220 = vmatpush.msra.mxu0 0.0
        %1221 = vmatpush.msra.mxu0 0.0
        %1222 = vmatpush.msra.mxu0 0.0
        %1223 = vmatpush.msra.mxu0 0.0
        %v1224 = vand.u32 %v1080, 4294901760
        %1225 = vmatpush.msra.mxu0 %v1224
        %v1226 = vand.u32 %v1083, 4294901760
        %1227 = vmatmul.f32.gmra.mxu0 %v1226
        %v1228 = vpop.f32.mrf.mxu0
        %v1229 = vadd.f32 %v1207, %v1228
        %1230 = vdwg.mxu0
        %1231 = vrot.lane.b32.xlu0 %v500, 108
        %v1232 = vpop.permute.xlu0 %1231
        %1234 = vrot.lane.b32.xlu0 %v496, 116
        %v1235 = vpop.permute.xlu0 %1234
        %v1237 = vsel %vm509, %v1232, %v1235
        %1238 = vrot.lane.b32.xlu0 %v498, 16
        %v1239 = vpop.permute.xlu0 %1238
        %v1241 = vmul.f32 %v496, %v1239
        %v1242 = vmul.f32 %v1237, %v499
        %1244 = vrot.lane.b32.xlu0 %v1242, 16
        %v1245 = vpop.permute.xlu0 %1244
        %v1247 = vadd.f32 %v1241, %v1245
        %v1248 = vmul.f32 %v1247, 0.35355338
        %1249 = vrot.lane.b32.xlu0 %v500, 76
        %v1250 = vpop.permute.xlu0 %1249
        %1252 = vrot.lane.b32.xlu0 %v496, 84
        %v1253 = vpop.permute.xlu0 %1252
        %v1255 = vsel %vm509, %v1250, %v1253
        %1256 = vrot.lane.b32.xlu0 %v498, 48
        %v1257 = vpop.permute.xlu0 %1256
        %v1259 = vmul.f32 %v496, %v1257
        %v1260 = vmul.f32 %v1255, %v499
        %1262 = vrot.lane.b32.xlu0 %v1260, 48
        %v1263 = vpop.permute.xlu0 %1262
        %v1265 = vadd.f32 %v1259, %v1263
        %1267 = vrot.lane.b32.xlu0 %v1248, 112
        %v1268 = vpop.permute.xlu0 %1267
        %1270 = vrot.lane.b32.xlu0 %v1265, 80
        %v1271 = vpop.permute.xlu0 %1270
        %v1272 = vsel %vm536, %v1268, 0
        %v1274 = vsel %vm536, %v1271, 0
        %1276 = vmatpush.xpose.msra.mxu0 0.0
        %1277 = vmatpush.xpose.msra.mxu0 0.0
        %1278 = vmatpush.xpose.msra.mxu0 0.0
        %1279 = vmatpush.xpose.msra.mxu0 0.0
        %1280 = vmatpush.xpose.msra.mxu0 0.0
        %1281 = vmatpush.xpose.msra.mxu0 0.0
        %1282 = vmatpush.xpose.msra.mxu0 0.0
        %1283 = vmatpush.xpose.msra.mxu0 0.0
        %1284 = vmatpush.xpose.msra.mxu0 0.0
        %1285 = vmatpush.xpose.msra.mxu0 0.0
        %1286 = vmatpush.xpose.msra.mxu0 0.0
        %1287 = vmatpush.xpose.msra.mxu0 0.0
        %1288 = vmatpush.xpose.msra.mxu0 0.0
        %1289 = vmatpush.xpose.msra.mxu0 0.0
        %1290 = vmatpush.xpose.msra.mxu0 0.0
        %v1291 = vand.u32 %v1274, 4294901760
        %1292 = vmatpush.xpose.msra.mxu0 %v1291
        %v1293 = vand.u32 %v1272, 4294901760
        %v1294 = vsub.f32 %v1272, %v1293
        %v1295 = vand.u32 %v1294, 4294901760
        %v1296 = vsub.f32 %v1294, %v1295
        %v1297 = vand.u32 %v1296, 4294901760
        %1298 = vmatmul.f32.gmra.mxu0 %v1297
        %v1299 = vpop.f32.mrf.mxu0
        %v1300 = vadd.f32 0.0, %v1299
        %1301 = vdwg.mxu0
        %1302 = vmatpush.xpose.msra.mxu0 0.0
        %1303 = vmatpush.xpose.msra.mxu0 0.0
        %1304 = vmatpush.xpose.msra.mxu0 0.0
        %1305 = vmatpush.xpose.msra.mxu0 0.0
        %1306 = vmatpush.xpose.msra.mxu0 0.0
        %1307 = vmatpush.xpose.msra.mxu0 0.0
        %1308 = vmatpush.xpose.msra.mxu0 0.0
        %1309 = vmatpush.xpose.msra.mxu0 0.0
        %1310 = vmatpush.xpose.msra.mxu0 0.0
        %1311 = vmatpush.xpose.msra.mxu0 0.0
        %1312 = vmatpush.xpose.msra.mxu0 0.0
        %1313 = vmatpush.xpose.msra.mxu0 0.0
        %1314 = vmatpush.xpose.msra.mxu0 0.0
        %1315 = vmatpush.xpose.msra.mxu0 0.0
        %1316 = vmatpush.xpose.msra.mxu0 0.0
        %v1317 = vand.u32 %v1274, 4294901760
        %v1318 = vsub.f32 %v1274, %v1317
        %v1319 = vand.u32 %v1318, 4294901760
        %v1320 = vsub.f32 %v1318, %v1319
        %v1321 = vand.u32 %v1320, 4294901760
        %1322 = vmatpush.xpose.msra.mxu0 %v1321
        %v1323 = vand.u32 %v1272, 4294901760
        %1324 = vmatmul.f32.gmra.mxu0 %v1323
        %v1325 = vpop.f32.mrf.mxu0
        %v1326 = vadd.f32 %v1300, %v1325
        %1327 = vdwg.mxu0
        %1328 = vmatpush.xpose.msra.mxu0 0.0
        %1329 = vmatpush.xpose.msra.mxu0 0.0
        %1330 = vmatpush.xpose.msra.mxu0 0.0
        %1331 = vmatpush.xpose.msra.mxu0 0.0
        %1332 = vmatpush.xpose.msra.mxu0 0.0
        %1333 = vmatpush.xpose.msra.mxu0 0.0
        %1334 = vmatpush.xpose.msra.mxu0 0.0
        %1335 = vmatpush.xpose.msra.mxu0 0.0
        %1336 = vmatpush.xpose.msra.mxu0 0.0
        %1337 = vmatpush.xpose.msra.mxu0 0.0
        %1338 = vmatpush.xpose.msra.mxu0 0.0
        %1339 = vmatpush.xpose.msra.mxu0 0.0
        %1340 = vmatpush.xpose.msra.mxu0 0.0
        %1341 = vmatpush.xpose.msra.mxu0 0.0
        %1342 = vmatpush.xpose.msra.mxu0 0.0
        %v1343 = vand.u32 %v1274, 4294901760
        %v1344 = vsub.f32 %v1274, %v1343
        %1345 = vmatpush.xpose.msra.mxu0 %v1344
        %v1346 = vand.u32 %v1272, 4294901760
        %v1347 = vsub.f32 %v1272, %v1346
        %1348 = vmatmul.f32.gmra.mxu0 %v1347
        %v1349 = vpop.f32.mrf.mxu0
        %v1350 = vadd.f32 %v1326, %v1349
        %1351 = vdwg.mxu0
        %1352 = vmatpush.xpose.msra.mxu0 0.0
        %1353 = vmatpush.xpose.msra.mxu0 0.0
        %1354 = vmatpush.xpose.msra.mxu0 0.0
        %1355 = vmatpush.xpose.msra.mxu0 0.0
        %1356 = vmatpush.xpose.msra.mxu0 0.0
        %1357 = vmatpush.xpose.msra.mxu0 0.0
        %1358 = vmatpush.xpose.msra.mxu0 0.0
        %1359 = vmatpush.xpose.msra.mxu0 0.0
        %1360 = vmatpush.xpose.msra.mxu0 0.0
        %1361 = vmatpush.xpose.msra.mxu0 0.0
        %1362 = vmatpush.xpose.msra.mxu0 0.0
        %1363 = vmatpush.xpose.msra.mxu0 0.0
        %1364 = vmatpush.xpose.msra.mxu0 0.0
        %1365 = vmatpush.xpose.msra.mxu0 0.0
        %1366 = vmatpush.xpose.msra.mxu0 0.0
        %v1367 = vand.u32 %v1274, 4294901760
        %1368 = vmatpush.xpose.msra.mxu0 %v1367
        %v1369 = vand.u32 %v1272, 4294901760
        %v1370 = vsub.f32 %v1272, %v1369
        %v1371 = vand.u32 %v1370, 4294901760
        %1372 = vmatmul.f32.gmra.mxu0 %v1371
        %v1373 = vpop.f32.mrf.mxu0
        %v1374 = vadd.f32 %v1350, %v1373
        %1375 = vdwg.mxu0
        %1376 = vmatpush.xpose.msra.mxu0 0.0
        %1377 = vmatpush.xpose.msra.mxu0 0.0
        %1378 = vmatpush.xpose.msra.mxu0 0.0
        %1379 = vmatpush.xpose.msra.mxu0 0.0
        %1380 = vmatpush.xpose.msra.mxu0 0.0
        %1381 = vmatpush.xpose.msra.mxu0 0.0
        %1382 = vmatpush.xpose.msra.mxu0 0.0
        %1383 = vmatpush.xpose.msra.mxu0 0.0
        %1384 = vmatpush.xpose.msra.mxu0 0.0
        %1385 = vmatpush.xpose.msra.mxu0 0.0
        %1386 = vmatpush.xpose.msra.mxu0 0.0
        %1387 = vmatpush.xpose.msra.mxu0 0.0
        %1388 = vmatpush.xpose.msra.mxu0 0.0
        %1389 = vmatpush.xpose.msra.mxu0 0.0
        %1390 = vmatpush.xpose.msra.mxu0 0.0
        %v1391 = vand.u32 %v1274, 4294901760
        %v1392 = vsub.f32 %v1274, %v1391
        %v1393 = vand.u32 %v1392, 4294901760
        %1394 = vmatpush.xpose.msra.mxu0 %v1393
        %v1395 = vand.u32 %v1272, 4294901760
        %1396 = vmatmul.f32.gmra.mxu0 %v1395
        %v1397 = vpop.f32.mrf.mxu0
        %v1398 = vadd.f32 %v1374, %v1397
        %1399 = vdwg.mxu0
        %1400 = vmatpush.xpose.msra.mxu0 0.0
        %1401 = vmatpush.xpose.msra.mxu0 0.0
        %1402 = vmatpush.xpose.msra.mxu0 0.0
        %1403 = vmatpush.xpose.msra.mxu0 0.0
        %1404 = vmatpush.xpose.msra.mxu0 0.0
        %1405 = vmatpush.xpose.msra.mxu0 0.0
        %1406 = vmatpush.xpose.msra.mxu0 0.0
        %1407 = vmatpush.xpose.msra.mxu0 0.0
        %1408 = vmatpush.xpose.msra.mxu0 0.0
        %1409 = vmatpush.xpose.msra.mxu0 0.0
        %1410 = vmatpush.xpose.msra.mxu0 0.0
        %1411 = vmatpush.xpose.msra.mxu0 0.0
        %1412 = vmatpush.xpose.msra.mxu0 0.0
        %1413 = vmatpush.xpose.msra.mxu0 0.0
        %1414 = vmatpush.xpose.msra.mxu0 0.0
        %v1415 = vand.u32 %v1274, 4294901760
        %1416 = vmatpush.xpose.msra.mxu0 %v1415
        %v1417 = vand.u32 %v1272, 4294901760
        %1418 = vmatmul.f32.gmra.mxu0 %v1417
        %v1419 = vpop.f32.mrf.mxu0
        %v1420 = vadd.f32 %v1398, %v1419
        %1421 = vdwg.mxu0
        %v1422 = vsel %vm536, %v1420, -inf
        %1423 = vmax.xlane.f32.xlu0 %v1422
        %v1424 = vpop.xlane.xlu0 %1423
        %v1425 = vsub.f32 %v1420, %v1424
        %v1426 = vmul.f32 %v1425, 1.442695
        %v1427 = vpow.pop %v1426
        %v1428 = vsel %vm536, %v1427, 0.0
        %1429 = vadd.xlane.f32.xlu0 %v1428
        %v1430 = vpop.xlane.xlu0 %1429
        %v1431 = vrcp.pop %v1430
        %v1432 = vmul.f32 %v1430, %v1431
        %v1433 = vsub.f32 1.0, %v1432
        %v1434 = vmul.f32 %v1431, %v1433
        %v1435 = vadd.f32 %v1431, %v1434
        %vm1436 = vweird.f32 %v1430
        %vm1437 = vweird.f32 %v1431
        %vm1438 = vmor %vm1436, %vm1437
        %v1439 = vsel %vm1438, %v1431, %v1435
        %v1440 = vand.u32 2147483647, %v1430
        %vm1441 = vcmp.eq.f32.partialorder %v1440, 8.507059e+37
        %v1442 = vand.u32 %v1430, 2147483648
        %v1443 = vor.u32 1.1754944e-38, %v1442
        %v1444 = vsel %vm1441, %v1443, %v1439
        %v1445 = vmul.f32 %v1427, %v1444
        %1446 = vrot.lane.b32.xlu0 %v496, 48
        %v1447 = vpop.permute.xlu0 %1446
        %v1450 = vsel %vm536, %v1445, 0
        %1452 = vmatpush.msra.mxu0 0.0
        %1453 = vmatpush.msra.mxu0 0.0
        %1454 = vmatpush.msra.mxu0 0.0
        %1455 = vmatpush.msra.mxu0 0.0
        %1456 = vmatpush.msra.mxu0 0.0
        %1457 = vmatpush.msra.mxu0 0.0
        %1458 = vmatpush.msra.mxu0 0.0
        %1459 = vmatpush.msra.mxu0 0.0
        %1460 = vmatpush.msra.mxu0 0.0
        %1461 = vmatpush.msra.mxu0 0.0
        %1462 = vmatpush.msra.mxu0 0.0
        %1463 = vmatpush.msra.mxu0 0.0
        %1464 = vmatpush.msra.mxu0 0.0
        %1465 = vmatpush.msra.mxu0 0.0
        %1466 = vmatpush.msra.mxu0 0.0
        %v1467 = vand.u32 %v1447, 4294901760
        %1468 = vmatpush.msra.mxu0 %v1467
        %v1469 = vand.u32 %v1450, 4294901760
        %v1470 = vsub.f32 %v1450, %v1469
        %v1471 = vand.u32 %v1470, 4294901760
        %v1472 = vsub.f32 %v1470, %v1471
        %v1473 = vand.u32 %v1472, 4294901760
        %1474 = vmatmul.f32.gmra.mxu0 %v1473
        %v1475 = vpop.f32.mrf.mxu0
        %v1476 = vadd.f32 0.0, %v1475
        %1477 = vdwg.mxu0
        %1478 = vmatpush.msra.mxu0 0.0
        %1479 = vmatpush.msra.mxu0 0.0
        %1480 = vmatpush.msra.mxu0 0.0
        %1481 = vmatpush.msra.mxu0 0.0
        %1482 = vmatpush.msra.mxu0 0.0
        %1483 = vmatpush.msra.mxu0 0.0
        %1484 = vmatpush.msra.mxu0 0.0
        %1485 = vmatpush.msra.mxu0 0.0
        %1486 = vmatpush.msra.mxu0 0.0
        %1487 = vmatpush.msra.mxu0 0.0
        %1488 = vmatpush.msra.mxu0 0.0
        %1489 = vmatpush.msra.mxu0 0.0
        %1490 = vmatpush.msra.mxu0 0.0
        %1491 = vmatpush.msra.mxu0 0.0
        %1492 = vmatpush.msra.mxu0 0.0
        %v1493 = vand.u32 %v1447, 4294901760
        %v1494 = vsub.f32 %v1447, %v1493
        %v1495 = vand.u32 %v1494, 4294901760
        %v1496 = vsub.f32 %v1494, %v1495
        %v1497 = vand.u32 %v1496, 4294901760
        %1498 = vmatpush.msra.mxu0 %v1497
        %v1499 = vand.u32 %v1450, 4294901760
        %1500 = vmatmul.f32.gmra.mxu0 %v1499
        %v1501 = vpop.f32.mrf.mxu0
        %v1502 = vadd.f32 %v1476, %v1501
        %1503 = vdwg.mxu0
        %1504 = vmatpush.msra.mxu0 0.0
        %1505 = vmatpush.msra.mxu0 0.0
        %1506 = vmatpush.msra.mxu0 0.0
        %1507 = vmatpush.msra.mxu0 0.0
        %1508 = vmatpush.msra.mxu0 0.0
        %1509 = vmatpush.msra.mxu0 0.0
        %1510 = vmatpush.msra.mxu0 0.0
        %1511 = vmatpush.msra.mxu0 0.0
        %1512 = vmatpush.msra.mxu0 0.0
        %1513 = vmatpush.msra.mxu0 0.0
        %1514 = vmatpush.msra.mxu0 0.0
        %1515 = vmatpush.msra.mxu0 0.0
        %1516 = vmatpush.msra.mxu0 0.0
        %1517 = vmatpush.msra.mxu0 0.0
        %1518 = vmatpush.msra.mxu0 0.0
        %v1519 = vand.u32 %v1447, 4294901760
        %v1520 = vsub.f32 %v1447, %v1519
        %1521 = vmatpush.msra.mxu0 %v1520
        %v1522 = vand.u32 %v1450, 4294901760
        %v1523 = vsub.f32 %v1450, %v1522
        %1524 = vmatmul.f32.gmra.mxu0 %v1523
        %v1525 = vpop.f32.mrf.mxu0
        %v1526 = vadd.f32 %v1502, %v1525
        %1527 = vdwg.mxu0
        %1528 = vmatpush.msra.mxu0 0.0
        %1529 = vmatpush.msra.mxu0 0.0
        %1530 = vmatpush.msra.mxu0 0.0
        %1531 = vmatpush.msra.mxu0 0.0
        %1532 = vmatpush.msra.mxu0 0.0
        %1533 = vmatpush.msra.mxu0 0.0
        %1534 = vmatpush.msra.mxu0 0.0
        %1535 = vmatpush.msra.mxu0 0.0
        %1536 = vmatpush.msra.mxu0 0.0
        %1537 = vmatpush.msra.mxu0 0.0
        %1538 = vmatpush.msra.mxu0 0.0
        %1539 = vmatpush.msra.mxu0 0.0
        %1540 = vmatpush.msra.mxu0 0.0
        %1541 = vmatpush.msra.mxu0 0.0
        %1542 = vmatpush.msra.mxu0 0.0
        %v1543 = vand.u32 %v1447, 4294901760
        %1544 = vmatpush.msra.mxu0 %v1543
        %v1545 = vand.u32 %v1450, 4294901760
        %v1546 = vsub.f32 %v1450, %v1545
        %v1547 = vand.u32 %v1546, 4294901760
        %1548 = vmatmul.f32.gmra.mxu0 %v1547
        %v1549 = vpop.f32.mrf.mxu0
        %v1550 = vadd.f32 %v1526, %v1549
        %1551 = vdwg.mxu0
        %1552 = vmatpush.msra.mxu0 0.0
        %1553 = vmatpush.msra.mxu0 0.0
        %1554 = vmatpush.msra.mxu0 0.0
        %1555 = vmatpush.msra.mxu0 0.0
        %1556 = vmatpush.msra.mxu0 0.0
        %1557 = vmatpush.msra.mxu0 0.0
        %1558 = vmatpush.msra.mxu0 0.0
        %1559 = vmatpush.msra.mxu0 0.0
        %1560 = vmatpush.msra.mxu0 0.0
        %1561 = vmatpush.msra.mxu0 0.0
        %1562 = vmatpush.msra.mxu0 0.0
        %1563 = vmatpush.msra.mxu0 0.0
        %1564 = vmatpush.msra.mxu0 0.0
        %1565 = vmatpush.msra.mxu0 0.0
        %1566 = vmatpush.msra.mxu0 0.0
        %v1567 = vand.u32 %v1447, 4294901760
        %v1568 = vsub.f32 %v1447, %v1567
        %v1569 = vand.u32 %v1568, 4294901760
        %1570 = vmatpush.msra.mxu0 %v1569
        %v1571 = vand.u32 %v1450, 4294901760
        %1572 = vmatmul.f32.gmra.mxu0 %v1571
        %v1573 = vpop.f32.mrf.mxu0
        %v1574 = vadd.f32 %v1550, %v1573
        %1575 = vdwg.mxu0
        %1576 = vmatpush.msra.mxu0 0.0
        %1577 = vmatpush.msra.mxu0 0.0
        %1578 = vmatpush.msra.mxu0 0.0
        %1579 = vmatpush.msra.mxu0 0.0
        %1580 = vmatpush.msra.mxu0 0.0
        %1581 = vmatpush.msra.mxu0 0.0
        %1582 = vmatpush.msra.mxu0 0.0
        %1583 = vmatpush.msra.mxu0 0.0
        %1584 = vmatpush.msra.mxu0 0.0
        %1585 = vmatpush.msra.mxu0 0.0
        %1586 = vmatpush.msra.mxu0 0.0
        %1587 = vmatpush.msra.mxu0 0.0
        %1588 = vmatpush.msra.mxu0 0.0
        %1589 = vmatpush.msra.mxu0 0.0
        %1590 = vmatpush.msra.mxu0 0.0
        %v1591 = vand.u32 %v1447, 4294901760
        %1592 = vmatpush.msra.mxu0 %v1591
        %v1593 = vand.u32 %v1450, 4294901760
        %1594 = vmatmul.f32.gmra.mxu0 %v1593
        %v1595 = vpop.f32.mrf.mxu0
        %v1596 = vadd.f32 %v1574, %v1595
        %1597 = vdwg.mxu0
        %1598 = vrot.lane.b32.xlu0 %v500, 100
        %v1599 = vpop.permute.xlu0 %1598
        %1601 = vrot.lane.b32.xlu0 %v496, 108
        %v1602 = vpop.permute.xlu0 %1601
        %v1604 = vsel %vm509, %v1599, %v1602
        %1605 = vrot.lane.b32.xlu0 %v498, 24
        %v1606 = vpop.permute.xlu0 %1605
        %v1608 = vmul.f32 %v496, %v1606
        %v1609 = vmul.f32 %v1604, %v499
        %1611 = vrot.lane.b32.xlu0 %v1609, 24
        %v1612 = vpop.permute.xlu0 %1611
        %v1614 = vadd.f32 %v1608, %v1612
        %v1615 = vmul.f32 %v1614, 0.35355338
        %1616 = vrot.lane.b32.xlu0 %v500, 68
        %v1617 = vpop.permute.xlu0 %1616
        %1619 = vrot.lane.b32.xlu0 %v496, 76
        %v1620 = vpop.permute.xlu0 %1619
        %v1622 = vsel %vm509, %v1617, %v1620
        %1623 = vrot.lane.b32.xlu0 %v498, 56
        %v1624 = vpop.permute.xlu0 %1623
        %v1626 = vmul.f32 %v496, %v1624
        %v1627 = vmul.f32 %v1622, %v499
        %1629 = vrot.lane.b32.xlu0 %v1627, 56
        %v1630 = vpop.permute.xlu0 %1629
        %v1632 = vadd.f32 %v1626, %v1630
        %1634 = vrot.lane.b32.xlu0 %v1615, 104
        %v1635 = vpop.permute.xlu0 %1634
        %1637 = vrot.lane.b32.xlu0 %v1632, 72
        %v1638 = vpop.permute.xlu0 %1637
        %v1639 = vsel %vm536, %v1635, 0
        %v1641 = vsel %vm536, %v1638, 0
        %1643 = vmatpush.xpose.msra.mxu0 0.0
        %1644 = vmatpush.xpose.msra.mxu0 0.0
        %1645 = vmatpush.xpose.msra.mxu0 0.0
        %1646 = vmatpush.xpose.msra.mxu0 0.0
        %1647 = vmatpush.xpose.msra.mxu0 0.0
        %1648 = vmatpush.xpose.msra.mxu0 0.0
        %1649 = vmatpush.xpose.msra.mxu0 0.0
        %1650 = vmatpush.xpose.msra.mxu0 0.0
        %1651 = vmatpush.xpose.msra.mxu0 0.0
        %1652 = vmatpush.xpose.msra.mxu0 0.0
        %1653 = vmatpush.xpose.msra.mxu0 0.0
        %1654 = vmatpush.xpose.msra.mxu0 0.0
        %1655 = vmatpush.xpose.msra.mxu0 0.0
        %1656 = vmatpush.xpose.msra.mxu0 0.0
        %1657 = vmatpush.xpose.msra.mxu0 0.0
        %v1658 = vand.u32 %v1641, 4294901760
        %1659 = vmatpush.xpose.msra.mxu0 %v1658
        %v1660 = vand.u32 %v1639, 4294901760
        %v1661 = vsub.f32 %v1639, %v1660
        %v1662 = vand.u32 %v1661, 4294901760
        %v1663 = vsub.f32 %v1661, %v1662
        %v1664 = vand.u32 %v1663, 4294901760
        %1665 = vmatmul.f32.gmra.mxu0 %v1664
        %v1666 = vpop.f32.mrf.mxu0
        %v1667 = vadd.f32 0.0, %v1666
        %1668 = vdwg.mxu0
        %1669 = vmatpush.xpose.msra.mxu0 0.0
        %1670 = vmatpush.xpose.msra.mxu0 0.0
        %1671 = vmatpush.xpose.msra.mxu0 0.0
        %1672 = vmatpush.xpose.msra.mxu0 0.0
        %1673 = vmatpush.xpose.msra.mxu0 0.0
        %1674 = vmatpush.xpose.msra.mxu0 0.0
        %1675 = vmatpush.xpose.msra.mxu0 0.0
        %1676 = vmatpush.xpose.msra.mxu0 0.0
        %1677 = vmatpush.xpose.msra.mxu0 0.0
        %1678 = vmatpush.xpose.msra.mxu0 0.0
        %1679 = vmatpush.xpose.msra.mxu0 0.0
        %1680 = vmatpush.xpose.msra.mxu0 0.0
        %1681 = vmatpush.xpose.msra.mxu0 0.0
        %1682 = vmatpush.xpose.msra.mxu0 0.0
        %1683 = vmatpush.xpose.msra.mxu0 0.0
        %v1684 = vand.u32 %v1641, 4294901760
        %v1685 = vsub.f32 %v1641, %v1684
        %v1686 = vand.u32 %v1685, 4294901760
        %v1687 = vsub.f32 %v1685, %v1686
        %v1688 = vand.u32 %v1687, 4294901760
        %1689 = vmatpush.xpose.msra.mxu0 %v1688
        %v1690 = vand.u32 %v1639, 4294901760
        %1691 = vmatmul.f32.gmra.mxu0 %v1690
        %v1692 = vpop.f32.mrf.mxu0
        %v1693 = vadd.f32 %v1667, %v1692
        %1694 = vdwg.mxu0
        %1695 = vmatpush.xpose.msra.mxu0 0.0
        %1696 = vmatpush.xpose.msra.mxu0 0.0
        %1697 = vmatpush.xpose.msra.mxu0 0.0
        %1698 = vmatpush.xpose.msra.mxu0 0.0
        %1699 = vmatpush.xpose.msra.mxu0 0.0
        %1700 = vmatpush.xpose.msra.mxu0 0.0
        %1701 = vmatpush.xpose.msra.mxu0 0.0
        %1702 = vmatpush.xpose.msra.mxu0 0.0
        %1703 = vmatpush.xpose.msra.mxu0 0.0
        %1704 = vmatpush.xpose.msra.mxu0 0.0
        %1705 = vmatpush.xpose.msra.mxu0 0.0
        %1706 = vmatpush.xpose.msra.mxu0 0.0
        %1707 = vmatpush.xpose.msra.mxu0 0.0
        %1708 = vmatpush.xpose.msra.mxu0 0.0
        %1709 = vmatpush.xpose.msra.mxu0 0.0
        %v1710 = vand.u32 %v1641, 4294901760
        %v1711 = vsub.f32 %v1641, %v1710
        %1712 = vmatpush.xpose.msra.mxu0 %v1711
        %v1713 = vand.u32 %v1639, 4294901760
        %v1714 = vsub.f32 %v1639, %v1713
        %1715 = vmatmul.f32.gmra.mxu0 %v1714
        %v1716 = vpop.f32.mrf.mxu0
        %v1717 = vadd.f32 %v1693, %v1716
        %1718 = vdwg.mxu0
        %1719 = vmatpush.xpose.msra.mxu0 0.0
        %1720 = vmatpush.xpose.msra.mxu0 0.0
        %1721 = vmatpush.xpose.msra.mxu0 0.0
        %1722 = vmatpush.xpose.msra.mxu0 0.0
        %1723 = vmatpush.xpose.msra.mxu0 0.0
        %1724 = vmatpush.xpose.msra.mxu0 0.0
        %1725 = vmatpush.xpose.msra.mxu0 0.0
        %1726 = vmatpush.xpose.msra.mxu0 0.0
        %1727 = vmatpush.xpose.msra.mxu0 0.0
        %1728 = vmatpush.xpose.msra.mxu0 0.0
        %1729 = vmatpush.xpose.msra.mxu0 0.0
        %1730 = vmatpush.xpose.msra.mxu0 0.0
        %1731 = vmatpush.xpose.msra.mxu0 0.0
        %1732 = vmatpush.xpose.msra.mxu0 0.0
        %1733 = vmatpush.xpose.msra.mxu0 0.0
        %v1734 = vand.u32 %v1641, 4294901760
        %1735 = vmatpush.xpose.msra.mxu0 %v1734
        %v1736 = vand.u32 %v1639, 4294901760
        %v1737 = vsub.f32 %v1639, %v1736
        %v1738 = vand.u32 %v1737, 4294901760
        %1739 = vmatmul.f32.gmra.mxu0 %v1738
        %v1740 = vpop.f32.mrf.mxu0
        %v1741 = vadd.f32 %v1717, %v1740
        %1742 = vdwg.mxu0
        %1743 = vmatpush.xpose.msra.mxu0 0.0
        %1744 = vmatpush.xpose.msra.mxu0 0.0
        %1745 = vmatpush.xpose.msra.mxu0 0.0
        %1746 = vmatpush.xpose.msra.mxu0 0.0
        %1747 = vmatpush.xpose.msra.mxu0 0.0
        %1748 = vmatpush.xpose.msra.mxu0 0.0
        %1749 = vmatpush.xpose.msra.mxu0 0.0
        %1750 = vmatpush.xpose.msra.mxu0 0.0
        %1751 = vmatpush.xpose.msra.mxu0 0.0
        %1752 = vmatpush.xpose.msra.mxu0 0.0
        %1753 = vmatpush.xpose.msra.mxu0 0.0
        %1754 = vmatpush.xpose.msra.mxu0 0.0
        %1755 = vmatpush.xpose.msra.mxu0 0.0
        %1756 = vmatpush.xpose.msra.mxu0 0.0
        %1757 = vmatpush.xpose.msra.mxu0 0.0
        %v1758 = vand.u32 %v1641, 4294901760
        %v1759 = vsub.f32 %v1641, %v1758
        %v1760 = vand.u32 %v1759, 4294901760
        %1761 = vmatpush.xpose.msra.mxu0 %v1760
        %v1762 = vand.u32 %v1639, 4294901760
        %1763 = vmatmul.f32.gmra.mxu0 %v1762
        %v1764 = vpop.f32.mrf.mxu0
        %v1765 = vadd.f32 %v1741, %v1764
        %1766 = vdwg.mxu0
        %1767 = vmatpush.xpose.msra.mxu0 0.0
        %1768 = vmatpush.xpose.msra.mxu0 0.0
        %1769 = vmatpush.xpose.msra.mxu0 0.0
        %1770 = vmatpush.xpose.msra.mxu0 0.0
        %1771 = vmatpush.xpose.msra.mxu0 0.0
        %1772 = vmatpush.xpose.msra.mxu0 0.0
        %1773 = vmatpush.xpose.msra.mxu0 0.0
        %1774 = vmatpush.xpose.msra.mxu0 0.0
        %1775 = vmatpush.xpose.msra.mxu0 0.0
        %1776 = vmatpush.xpose.msra.mxu0 0.0
        %1777 = vmatpush.xpose.msra.mxu0 0.0
        %1778 = vmatpush.xpose.msra.mxu0 0.0
        %1779 = vmatpush.xpose.msra.mxu0 0.0
        %1780 = vmatpush.xpose.msra.mxu0 0.0
        %1781 = vmatpush.xpose.msra.mxu0 0.0
        %v1782 = vand.u32 %v1641, 4294901760
        %1783 = vmatpush.xpose.msra.mxu0 %v1782
        %v1784 = vand.u32 %v1639, 4294901760
        %1785 = vmatmul.f32.gmra.mxu0 %v1784
        %v1786 = vpop.f32.mrf.mxu0
        %v1787 = vadd.f32 %v1765, %v1786
        %1788 = vdwg.mxu0
        %v1789 = vsel %vm536, %v1787, -inf
        %1790 = vmax.xlane.f32.xlu0 %v1789
        %v1791 = vpop.xlane.xlu0 %1790
        %v1792 = vsub.f32 %v1787, %v1791
        %v1793 = vmul.f32 %v1792, 1.442695
        %v1794 = vpow.pop %v1793
        %v1795 = vsel %vm536, %v1794, 0.0
        %1796 = vadd.xlane.f32.xlu0 %v1795
        %v1797 = vpop.xlane.xlu0 %1796
        %v1798 = vrcp.pop %v1797
        %v1799 = vmul.f32 %v1797, %v1798
        %v1800 = vsub.f32 1.0, %v1799
        %v1801 = vmul.f32 %v1798, %v1800
        %v1802 = vadd.f32 %v1798, %v1801
        %vm1803 = vweird.f32 %v1797
        %vm1804 = vweird.f32 %v1798
        %vm1805 = vmor %vm1803, %vm1804
        %v1806 = vsel %vm1805, %v1798, %v1802
        %v1807 = vand.u32 2147483647, %v1797
        %vm1808 = vcmp.eq.f32.partialorder %v1807, 8.507059e+37
        %v1809 = vand.u32 %v1797, 2147483648
        %v1810 = vor.u32 1.1754944e-38, %v1809
        %v1811 = vsel %vm1808, %v1810, %v1806
        %v1812 = vmul.f32 %v1794, %v1811
        %1813 = vrot.lane.b32.xlu0 %v496, 40
        %v1814 = vpop.permute.xlu0 %1813
        %v1817 = vsel %vm536, %v1812, 0
        %1819 = vmatpush.msra.mxu0 0.0
        %1820 = vmatpush.msra.mxu0 0.0
        %1821 = vmatpush.msra.mxu0 0.0
        %1822 = vmatpush.msra.mxu0 0.0
        %1823 = vmatpush.msra.mxu0 0.0
        %1824 = vmatpush.msra.mxu0 0.0
        %1825 = vmatpush.msra.mxu0 0.0
        %1826 = vmatpush.msra.mxu0 0.0
        %1827 = vmatpush.msra.mxu0 0.0
        %1828 = vmatpush.msra.mxu0 0.0
        %1829 = vmatpush.msra.mxu0 0.0
        %1830 = vmatpush.msra.mxu0 0.0
        %1831 = vmatpush.msra.mxu0 0.0
        %1832 = vmatpush.msra.mxu0 0.0
        %1833 = vmatpush.msra.mxu0 0.0
        %v1834 = vand.u32 %v1814, 4294901760
        %1835 = vmatpush.msra.mxu0 %v1834
        %v1836 = vand.u32 %v1817, 4294901760
        %v1837 = vsub.f32 %v1817, %v1836
        %v1838 = vand.u32 %v1837, 4294901760
        %v1839 = vsub.f32 %v1837, %v1838
        %v1840 = vand.u32 %v1839, 4294901760
        %1841 = vmatmul.f32.gmra.mxu0 %v1840
        %v1842 = vpop.f32.mrf.mxu0
        %v1843 = vadd.f32 0.0, %v1842
        %1844 = vdwg.mxu0
        %1845 = vmatpush.msra.mxu0 0.0
        %1846 = vmatpush.msra.mxu0 0.0
        %1847 = vmatpush.msra.mxu0 0.0
        %1848 = vmatpush.msra.mxu0 0.0
        %1849 = vmatpush.msra.mxu0 0.0
        %1850 = vmatpush.msra.mxu0 0.0
        %1851 = vmatpush.msra.mxu0 0.0
        %1852 = vmatpush.msra.mxu0 0.0
        %1853 = vmatpush.msra.mxu0 0.0
        %1854 = vmatpush.msra.mxu0 0.0
        %1855 = vmatpush.msra.mxu0 0.0
        %1856 = vmatpush.msra.mxu0 0.0
        %1857 = vmatpush.msra.mxu0 0.0
        %1858 = vmatpush.msra.mxu0 0.0
        %1859 = vmatpush.msra.mxu0 0.0
        %v1860 = vand.u32 %v1814, 4294901760
        %v1861 = vsub.f32 %v1814, %v1860
        %v1862 = vand.u32 %v1861, 4294901760
        %v1863 = vsub.f32 %v1861, %v1862
        %v1864 = vand.u32 %v1863, 4294901760
        %1865 = vmatpush.msra.mxu0 %v1864
        %v1866 = vand.u32 %v1817, 4294901760
        %1867 = vmatmul.f32.gmra.mxu0 %v1866
        %v1868 = vpop.f32.mrf.mxu0
        %v1869 = vadd.f32 %v1843, %v1868
        %1870 = vdwg.mxu0
        %1871 = vmatpush.msra.mxu0 0.0
        %1872 = vmatpush.msra.mxu0 0.0
        %1873 = vmatpush.msra.mxu0 0.0
        %1874 = vmatpush.msra.mxu0 0.0
        %1875 = vmatpush.msra.mxu0 0.0
        %1876 = vmatpush.msra.mxu0 0.0
        %1877 = vmatpush.msra.mxu0 0.0
        %1878 = vmatpush.msra.mxu0 0.0
        %1879 = vmatpush.msra.mxu0 0.0
        %1880 = vmatpush.msra.mxu0 0.0
        %1881 = vmatpush.msra.mxu0 0.0
        %1882 = vmatpush.msra.mxu0 0.0
        %1883 = vmatpush.msra.mxu0 0.0
        %1884 = vmatpush.msra.mxu0 0.0
        %1885 = vmatpush.msra.mxu0 0.0
        %v1886 = vand.u32 %v1814, 4294901760
        %v1887 = vsub.f32 %v1814, %v1886
        %1888 = vmatpush.msra.mxu0 %v1887
        %v1889 = vand.u32 %v1817, 4294901760
        %v1890 = vsub.f32 %v1817, %v1889
        %1891 = vmatmul.f32.gmra.mxu0 %v1890
        %v1892 = vpop.f32.mrf.mxu0
        %v1893 = vadd.f32 %v1869, %v1892
        %1894 = vdwg.mxu0
        %1895 = vmatpush.msra.mxu0 0.0
        %1896 = vmatpush.msra.mxu0 0.0
        %1897 = vmatpush.msra.mxu0 0.0
        %1898 = vmatpush.msra.mxu0 0.0
        %1899 = vmatpush.msra.mxu0 0.0
        %1900 = vmatpush.msra.mxu0 0.0
        %1901 = vmatpush.msra.mxu0 0.0
        %1902 = vmatpush.msra.mxu0 0.0
        %1903 = vmatpush.msra.mxu0 0.0
        %1904 = vmatpush.msra.mxu0 0.0
        %1905 = vmatpush.msra.mxu0 0.0
        %1906 = vmatpush.msra.mxu0 0.0
        %1907 = vmatpush.msra.mxu0 0.0
        %1908 = vmatpush.msra.mxu0 0.0
        %1909 = vmatpush.msra.mxu0 0.0
        %v1910 = vand.u32 %v1814, 4294901760
        %1911 = vmatpush.msra.mxu0 %v1910
        %v1912 = vand.u32 %v1817, 4294901760
        %v1913 = vsub.f32 %v1817, %v1912
        %v1914 = vand.u32 %v1913, 4294901760
        %1915 = vmatmul.f32.gmra.mxu0 %v1914
        %v1916 = vpop.f32.mrf.mxu0
        %v1917 = vadd.f32 %v1893, %v1916
        %1918 = vdwg.mxu0
        %1919 = vmatpush.msra.mxu0 0.0
        %1920 = vmatpush.msra.mxu0 0.0
        %1921 = vmatpush.msra.mxu0 0.0
        %1922 = vmatpush.msra.mxu0 0.0
        %1923 = vmatpush.msra.mxu0 0.0
        %1924 = vmatpush.msra.mxu0 0.0
        %1925 = vmatpush.msra.mxu0 0.0
        %1926 = vmatpush.msra.mxu0 0.0
        %1927 = vmatpush.msra.mxu0 0.0
        %1928 = vmatpush.msra.mxu0 0.0
        %1929 = vmatpush.msra.mxu0 0.0
        %1930 = vmatpush.msra.mxu0 0.0
        %1931 = vmatpush.msra.mxu0 0.0
        %1932 = vmatpush.msra.mxu0 0.0
        %1933 = vmatpush.msra.mxu0 0.0
        %v1934 = vand.u32 %v1814, 4294901760
        %v1935 = vsub.f32 %v1814, %v1934
        %v1936 = vand.u32 %v1935, 4294901760
        %1937 = vmatpush.msra.mxu0 %v1936
        %v1938 = vand.u32 %v1817, 4294901760
        %1939 = vmatmul.f32.gmra.mxu0 %v1938
        %v1940 = vpop.f32.mrf.mxu0
        %v1941 = vadd.f32 %v1917, %v1940
        %1942 = vdwg.mxu0
        %1943 = vmatpush.msra.mxu0 0.0
        %1944 = vmatpush.msra.mxu0 0.0
        %1945 = vmatpush.msra.mxu0 0.0
        %1946 = vmatpush.msra.mxu0 0.0
        %1947 = vmatpush.msra.mxu0 0.0
        %1948 = vmatpush.msra.mxu0 0.0
        %1949 = vmatpush.msra.mxu0 0.0
        %1950 = vmatpush.msra.mxu0 0.0
        %1951 = vmatpush.msra.mxu0 0.0
        %1952 = vmatpush.msra.mxu0 0.0
        %1953 = vmatpush.msra.mxu0 0.0
        %1954 = vmatpush.msra.mxu0 0.0
        %1955 = vmatpush.msra.mxu0 0.0
        %1956 = vmatpush.msra.mxu0 0.0
        %1957 = vmatpush.msra.mxu0 0.0
        %v1958 = vand.u32 %v1814, 4294901760
        %1959 = vmatpush.msra.mxu0 %v1958
        %v1960 = vand.u32 %v1817, 4294901760
        %1961 = vmatmul.f32.gmra.mxu0 %v1960
        %v1962 = vpop.f32.mrf.mxu0
        %v1963 = vadd.f32 %v1941, %v1962
        %1964 = vdwg.mxu0
        %1966 = vrot.lane.b32.xlu0 %v1229, 8
        %v1967 = vpop.permute.xlu0 %1966
        %1970 = vrot.lane.b32.xlu0 %v1596, 16
        %v1971 = vpop.permute.xlu0 %1970
        %1974 = vrot.lane.b32.xlu0 %v1963, 24
        %v1975 = vpop.permute.xlu0 %1974
        %v1977 = vsel %vm536, %v862, %v1967
        %vm1978 = vcmask 130048
        %v1979 = vsel %vm1978, %v1977, %v1971
        %vm1980 = vcmask 195584
        %v1981 = vsel %vm1980, %v1979, %v1975
        %v1982 = vld [vmem:[#allocation7] sm:$0xff]
        %v1983 = vld [vmem:[#allocation7 + $0x8] sm:$0xff]
        %v1984 = vld [vmem:[#allocation7 + $0x10] sm:$0xff]
        %v1985 = vld [vmem:[#allocation7 + $0x18] sm:$0xff]
        %v1987 = vsel %vm309, %v1981, 0
        %1989 = vmatpush.msra.mxu0 0.0
        %1990 = vmatpush.msra.mxu0 0.0
        %1991 = vmatpush.msra.mxu0 0.0
        %1992 = vmatpush.msra.mxu0 0.0
        %1993 = vmatpush.msra.mxu0 0.0
        %1994 = vmatpush.msra.mxu0 0.0
        %1995 = vmatpush.msra.mxu0 0.0
        %1996 = vmatpush.msra.mxu0 0.0
        %1997 = vmatpush.msra.mxu0 0.0
        %1998 = vmatpush.msra.mxu0 0.0
        %1999 = vmatpush.msra.mxu0 0.0
        %2000 = vmatpush.msra.mxu0 0.0
        %v2001 = vand.u32 %v1985, 4294901760
        %2002 = vmatpush.msra.mxu0 %v2001
        %v2003 = vand.u32 %v1984, 4294901760
        %2004 = vmatpush.msra.mxu0 %v2003
        %v2005 = vand.u32 %v1983, 4294901760
        %2006 = vmatpush.msra.mxu0 %v2005
        %v2007 = vand.u32 %v1982, 4294901760
        %2008 = vmatpush.msra.mxu0 %v2007
        %v2009 = vand.u32 %v1987, 4294901760
        %v2010 = vsub.f32 %v1987, %v2009
        %v2011 = vand.u32 %v2010, 4294901760
        %v2012 = vsub.f32 %v2010, %v2011
        %v2013 = vand.u32 %v2012, 4294901760
        %2014 = vmatmul.f32.gmra.mxu0 %v2013
        %v2015 = vpop.f32.mrf.mxu0
        %v2016 = vadd.f32 0.0, %v2015
        %2017 = vdwg.mxu0
        %2018 = vmatpush.msra.mxu0 0.0
        %2019 = vmatpush.msra.mxu0 0.0
        %2020 = vmatpush.msra.mxu0 0.0
        %2021 = vmatpush.msra.mxu0 0.0
        %2022 = vmatpush.msra.mxu0 0.0
        %2023 = vmatpush.msra.mxu0 0.0
        %2024 = vmatpush.msra.mxu0 0.0
        %2025 = vmatpush.msra.mxu0 0.0
        %2026 = vmatpush.msra.mxu0 0.0
        %2027 = vmatpush.msra.mxu0 0.0
        %2028 = vmatpush.msra.mxu0 0.0
        %2029 = vmatpush.msra.mxu0 0.0
        %v2030 = vand.u32 %v1985, 4294901760
        %v2031 = vsub.f32 %v1985, %v2030
        %v2032 = vand.u32 %v2031, 4294901760
        %v2033 = vsub.f32 %v2031, %v2032
        %v2034 = vand.u32 %v2033, 4294901760
        %2035 = vmatpush.msra.mxu0 %v2034
        %v2036 = vand.u32 %v1984, 4294901760
        %v2037 = vsub.f32 %v1984, %v2036
        %v2038 = vand.u32 %v2037, 4294901760
        %v2039 = vsub.f32 %v2037, %v2038
        %v2040 = vand.u32 %v2039, 4294901760
        %2041 = vmatpush.msra.mxu0 %v2040
        %v2042 = vand.u32 %v1983, 4294901760
        %v2043 = vsub.f32 %v1983, %v2042
        %v2044 = vand.u32 %v2043, 4294901760
        %v2045 = vsub.f32 %v2043, %v2044
        %v2046 = vand.u32 %v2045, 4294901760
        %2047 = vmatpush.msra.mxu0 %v2046
        %v2048 = vand.u32 %v1982, 4294901760
        %v2049 = vsub.f32 %v1982, %v2048
        %v2050 = vand.u32 %v2049, 4294901760
        %v2051 = vsub.f32 %v2049, %v2050
        %v2052 = vand.u32 %v2051, 4294901760
        %2053 = vmatpush.msra.mxu0 %v2052
        %v2054 = vand.u32 %v1987, 4294901760
        %2055 = vmatmul.f32.gmra.mxu0 %v2054
        %v2056 = vpop.f32.mrf.mxu0
        %v2057 = vadd.f32 %v2016, %v2056
        %2058 = vdwg.mxu0
        %2059 = vmatpush.msra.mxu0 0.0
        %2060 = vmatpush.msra.mxu0 0.0
        %2061 = vmatpush.msra.mxu0 0.0
        %2062 = vmatpush.msra.mxu0 0.0
        %2063 = vmatpush.msra.mxu0 0.0
        %2064 = vmatpush.msra.mxu0 0.0
        %2065 = vmatpush.msra.mxu0 0.0
        %2066 = vmatpush.msra.mxu0 0.0
        %2067 = vmatpush.msra.mxu0 0.0
        %2068 = vmatpush.msra.mxu0 0.0
        %2069 = vmatpush.msra.mxu0 0.0
        %2070 = vmatpush.msra.mxu0 0.0
        %v2071 = vand.u32 %v1985, 4294901760
        %v2072 = vsub.f32 %v1985, %v2071
        %2073 = vmatpush.msra.mxu0 %v2072
        %v2074 = vand.u32 %v1984, 4294901760
        %v2075 = vsub.f32 %v1984, %v2074
        %2076 = vmatpush.msra.mxu0 %v2075
        %v2077 = vand.u32 %v1983, 4294901760
        %v2078 = vsub.f32 %v1983, %v2077
        %2079 = vmatpush.msra.mxu0 %v2078
        %v2080 = vand.u32 %v1982, 4294901760
        %v2081 = vsub.f32 %v1982, %v2080
        %2082 = vmatpush.msra.mxu0 %v2081
        %v2083 = vand.u32 %v1987, 4294901760
        %v2084 = vsub.f32 %v1987, %v2083
        %2085 = vmatmul.f32.gmra.mxu0 %v2084
        %v2086 = vpop.f32.mrf.mxu0
        %v2087 = vadd.f32 %v2057, %v2086
        %2088 = vdwg.mxu0
        %2089 = vmatpush.msra.mxu0 0.0
        %2090 = vmatpush.msra.mxu0 0.0
        %2091 = vmatpush.msra.mxu0 0.0
        %2092 = vmatpush.msra.mxu0 0.0
        %2093 = vmatpush.msra.mxu0 0.0
        %2094 = vmatpush.msra.mxu0 0.0
        %2095 = vmatpush.msra.mxu0 0.0
        %2096 = vmatpush.msra.mxu0 0.0
        %2097 = vmatpush.msra.mxu0 0.0
        %2098 = vmatpush.msra.mxu0 0.0
        %2099 = vmatpush.msra.mxu0 0.0
        %2100 = vmatpush.msra.mxu0 0.0
        %v2101 = vand.u32 %v1985, 4294901760
        %2102 = vmatpush.msra.mxu0 %v2101
        %v2103 = vand.u32 %v1984, 4294901760
        %2104 = vmatpush.msra.mxu0 %v2103
        %v2105 = vand.u32 %v1983, 4294901760
        %2106 = vmatpush.msra.mxu0 %v2105
        %v2107 = vand.u32 %v1982, 4294901760
        %2108 = vmatpush.msra.mxu0 %v2107
        %v2109 = vand.u32 %v1987, 4294901760
        %v2110 = vsub.f32 %v1987, %v2109
        %v2111 = vand.u32 %v2110, 4294901760
        %2112 = vmatmul.f32.gmra.mxu0 %v2111
        %v2113 = vpop.f32.mrf.mxu0
        %v2114 = vadd.f32 %v2087, %v2113
        %2115 = vdwg.mxu0
        %2116 = vmatpush.msra.mxu0 0.0
        %2117 = vmatpush.msra.mxu0 0.0
        %2118 = vmatpush.msra.mxu0 0.0
        %2119 = vmatpush.msra.mxu0 0.0
        %2120 = vmatpush.msra.mxu0 0.0
        %2121 = vmatpush.msra.mxu0 0.0
        %2122 = vmatpush.msra.mxu0 0.0
        %2123 = vmatpush.msra.mxu0 0.0
        %2124 = vmatpush.msra.mxu0 0.0
        %2125 = vmatpush.msra.mxu0 0.0
        %2126 = vmatpush.msra.mxu0 0.0
        %2127 = vmatpush.msra.mxu0 0.0
        %v2128 = vand.u32 %v1985, 4294901760
        %v2129 = vsub.f32 %v1985, %v2128
        %v2130 = vand.u32 %v2129, 4294901760
        %2131 = vmatpush.msra.mxu0 %v2130
        %v2132 = vand.u32 %v1984, 4294901760
        %v2133 = vsub.f32 %v1984, %v2132
        %v2134 = vand.u32 %v2133, 4294901760
        %2135 = vmatpush.msra.mxu0 %v2134
        %v2136 = vand.u32 %v1983, 4294901760
        %v2137 = vsub.f32 %v1983, %v2136
        %v2138 = vand.u32 %v2137, 4294901760
        %2139 = vmatpush.msra.mxu0 %v2138
        %v2140 = vand.u32 %v1982, 4294901760
        %v2141 = vsub.f32 %v1982, %v2140
        %v2142 = vand.u32 %v2141, 4294901760
        %2143 = vmatpush.msra.mxu0 %v2142
        %v2144 = vand.u32 %v1987, 4294901760
        %2145 = vmatmul.f32.gmra.mxu0 %v2144
        %v2146 = vpop.f32.mrf.mxu0
        %v2147 = vadd.f32 %v2114, %v2146
        %2148 = vdwg.mxu0
        %2149 = vmatpush.msra.mxu0 0.0
        %2150 = vmatpush.msra.mxu0 0.0
        %2151 = vmatpush.msra.mxu0 0.0
        %2152 = vmatpush.msra.mxu0 0.0
        %2153 = vmatpush.msra.mxu0 0.0
        %2154 = vmatpush.msra.mxu0 0.0
        %2155 = vmatpush.msra.mxu0 0.0
        %2156 = vmatpush.msra.mxu0 0.0
        %2157 = vmatpush.msra.mxu0 0.0
        %2158 = vmatpush.msra.mxu0 0.0
        %2159 = vmatpush.msra.mxu0 0.0
        %2160 = vmatpush.msra.mxu0 0.0
        %v2161 = vand.u32 %v1985, 4294901760
        %2162 = vmatpush.msra.mxu0 %v2161
        %v2163 = vand.u32 %v1984, 4294901760
        %2164 = vmatpush.msra.mxu0 %v2163
        %v2165 = vand.u32 %v1983, 4294901760
        %2166 = vmatpush.msra.mxu0 %v2165
        %v2167 = vand.u32 %v1982, 4294901760
        %2168 = vmatpush.msra.mxu0 %v2167
        %v2169 = vand.u32 %v1987, 4294901760
        %2170 = vmatmul.f32.gmra.mxu0 %v2169
        %v2171 = vpop.f32.mrf.mxu0
        %v2172 = vadd.f32 %v2147, %v2171
        %2173 = vdwg.mxu0
        %2174 = vst.msk [vmem:[%s303] sm:$0xff] %vm309, %v2172
        %s2175 = sand.u32 %s142, 1
        %s2176 = scalar_lea.sflag [#allocation4], %s2175
        %s2177 = sand.u32 %s142, 1
        %s2178 = smul.addr %s2177, 8
        %s2179 = scalar_lea.vmem [#allocation11], %s2178
        // Predicated region
        $region61: #{pixtral_attention.1} parent=39 // pred_check
          %p2180 = pneg %p152
        $region62: #{pixtral_attention.1} parent=39 // pred_check_branch
          %2182 = sbr.rel (%p2180) target = $region64
        $region63: #{pixtral_attention.1} parent=39 // pred_region
          %2184 = vsyncadd %s2176, 0
          %s2185 = smul.addr %s24, 8
          %s2186 = scalar_lea.hbm %s5, %s2185
          %s2188 = sshll.u32 %s2179, 4
          %s2189 = int_to_ptr.vmem [resolvable:$true] %s2188
          %s2190 = sshll.u32 %s2186, 4
          %s2191 = int_to_ptr.hbm [resolvable:$true] %s2190
          %2193 = dma.vmem_to_hbm [thread:$0]  %s2189, 128, %s2191, %s2176
        $region64: #{pixtral_attention.1} parent=39 // pred_fallthru
          _
      $region40: #{pixtral_attention.1} parent=5 // pred_fallthru
        _
      %p2194 = scmp.le.s32.totalorder 2, %s19
      // Predicated region
      $region65: #{pixtral_attention.1} parent=5 // pred_check
        %p2195 = pneg %p2194
      $region66: #{pixtral_attention.1} parent=5 // pred_check_branch
        %2197 = sbr.rel (%p2195) target = $region68
      $region67: #{pixtral_attention.1} parent=5 // pred_region
        %s2198 = ssub.s32 %s19, 2
        // Predicated region
        $region69: #{pixtral_attention.1} parent=67 // pred_check
          %p2199 = pneg %p158
        $region70: #{pixtral_attention.1} parent=67 // pred_check_branch
          %2201 = sbr.rel (%p2199) target = $region72
        $region71: #{pixtral_attention.1} parent=67 // pred_region
          %s2202 = sand.u32 %s143, 1
          %s2203 = scalar_lea.sflag [#allocation4], %s2202
          %s2204 = sand.u32 %s143, 1
          %s2205 = smul.addr %s2204, 8
          %s2206 = scalar_lea.vmem [#allocation11], %s2205
          %2208 = dma.done %s2203, 128
        $region72: #{pixtral_attention.1} parent=67 // pred_fallthru
          _
      $region68: #{pixtral_attention.1} parent=5 // pred_fallthru
        _
    $region6: #{pixtral_attention.1} parent=1 // loop_footer
      %s23 = sadd.s32 1, %s19
    $region7: #{pixtral_attention.1} parent=1 // loop_footer_branch
      %18 = sbr.rel target = $region3
    $region8: #{pixtral_attention.1} parent=1 // loop_exit
      _
    %2209 = vsyncpa [#allocation3], 1
    %s2210 = scalar_lea.sflag [#allocation3], 1
    %2211 = vsyncpa %s2210, 1
    %2212 = vsyncpa [#allocation6], 1
    %2213 = vsyncpa [#allocation9], 1
    %2214 = vsyncpa [#allocation4], 1
    %s2215 = scalar_lea.sflag [#allocation4], 1
    %2216 = vsyncpa %s2215, 1

</llo_original>
